<compile_context>
chip_gen: v6e
topology: v6e:2x2x1
jax: 0.10.0
libtpu: 0.0.40
codegen_flags: <defaults>
</compile_context>

<pallas_src>
import jax
import jax.numpy as jnp
from jax.experimental import pallas as pl
from jax.experimental.pallas import tpu as pltpu

LANE = 128


def _round_up(n, m):
    return ((n + m - 1) // m) * m


def _vmem_budget_bytes():
    """Per-generation scoped-VMEM budget (v7x: 64 MiB physical; v5e/v6e: 128)."""
    cap = None
    try:
        info = pltpu.get_tpu_info()
        cap = getattr(info, "vmem_capacity_bytes", None)
    except Exception:
        cap = None
    if not cap:
        cap = 64 * 1024 * 1024            # conservative: assume v7x-sized VMEM
    return min((int(cap) * 3) // 4, 100 * 1024 * 1024)


def _pick_time_block(T, B, target_rows):
    """Timesteps per grid step.  rows = Tt*B must be a multiple of 8 (sublane
    tile) unless Tt == T (block == full array dim).  Prefer 256-/128-aligned
    rows (full MXU passes, unmasked stores), then the largest fitting block."""
    if T * B <= target_rows:
        return T
    best_tt, best_key = None, (-1, -1)
    for tt in range(1, T + 1):
        if T % tt:
            continue
        rows = tt * B
        if rows > target_rows or rows % 8:
            continue
        align = 3 if rows % 256 == 0 else (2 if rows % 128 == 0 else 1)
        key = (align, rows)
        if key > best_key:
            best_key, best_tt = key, tt
    # Fallback (pathological shapes only): full-array block is always legal.
    return best_tt if best_tt is not None else T


def pack_lstm_params(W_all, b_all, U_all, lane=LANE):
    """Per-gate (4,I,H)/(4,1,H)/(4,H,H) -> fused (I,4Hp)/(1,4Hp)/(Hp,4Hp).

    Each gate's H is zero-padded up to Hp (multiple of 128) so the per-gate
    lane slices in the kernel are tile-aligned and h stores are lane-dense.
    Gate order along the 4Hp axis: i, f, c(=g), o."""
    H = W_all.shape[-1]
    Hp = _round_up(H, lane)
    p = Hp - H
    W = jnp.pad(W_all, ((0, 0), (0, 0), (0, p)))
    b = jnp.pad(b_all, ((0, 0), (0, 0), (0, p)))
    U = jnp.pad(U_all, ((0, 0), (0, p), (0, p)))
    W_cat = jnp.concatenate(list(W), axis=-1)     # (I, 4Hp)
    b_cat = jnp.concatenate(list(b), axis=-1)     # (1, 4Hp)
    U_cat = jnp.concatenate(list(U), axis=-1)     # (Hp, 4Hp)
    return W_cat, b_cat, U_cat


def lstm_forward(x, z, u=None, tau=None, *, params,
                 matmul_dtype=jnp.bfloat16, h_dtype=jnp.float32,
                 time_block=None, single_buffer_invariants=True):
    """Mirrors LSTM.forward(x, z, u, tau) for num_layers=1, fc=None, tau=None."""
    # `u` is accepted but (with tau=None) never used in the computation,
    # exactly like the reference's untaken branch.
    del u
    # TODO(synk): the tau-is-not-None branch in the reference calls `torch.car`
    # (a typo) and is unrunnable; it is not implemented here.
    assert tau is None

    W_cat, b_cat, U_cat = params                  # (I,4Hp), (1,4Hp), (Hp,4Hp)
    B, T, I = x.shape
    H = z.shape[-1]
    Hp = W_cat.shape[-1] // 4
    assert W_cat.shape == (I, 4 * Hp) and U_cat.shape == (Hp, 4 * Hp)
    assert Hp >= H and Hp % LANE == 0

    md = jnp.dtype(matmul_dtype)
    hd = jnp.dtype(h_dtype)

    # Pad z's hidden dim to Hp (zero padding keeps padded lanes exactly zero
    # throughout the gate math; they are sliced off in the wrapper).
    z_p = jnp.pad(z, ((0, 0), (0, 0), (0, Hp - H))) if Hp > H else z
    z_p = z_p.astype(jnp.float32)

    # Hoisted, time-invariant U-path: (z @ U_cat) + b, computed ONCE here
    # (always f32) and passed to the kernel as a tiny (2, B, 4Hp) input.
    zub = (jnp.dot(z_p.reshape(2 * B, Hp), U_cat.astype(jnp.float32),
                   precision=jax.lax.Precision.HIGHEST)
           .reshape(2, B, 4 * Hp) + b_cat.astype(jnp.float32))

    # Per-generation VMEM budget and rows-per-block target.
    vmem_budget = _vmem_budget_bytes()
    if time_block is None:
        per_row = (2 * I * md.itemsize            # double-buffered x block
                   + 2 * 2 * Hp * hd.itemsize     # double-buffered h block
                   + 4 * Hp * 4                   # gx slab (f32)
                   + 2 * 6 * Hp * 4)              # gate/c/h f32 transients
        fixed = (I * 4 * Hp * md.itemsize * (1 if single_buffer_invariants else 2)
                 + (2 * B * 4 * Hp + 2 * B * Hp + 2 * 2 * B * Hp) * 4)
        target_rows = max(B, min(1024, int((vmem_budget * 6 // 10 - fixed)
                                           // per_row)))
        Tt = _pick_time_block(T, B, target_rows)
    else:
        Tt = time_block
    assert T % Tt == 0
    rows = Tt * B                                  # matmul M per grid step
    nblk = T // Tt

    # Time-major x, flattened so the fused gate matmul sees M = rows per step.
    x2 = jnp.transpose(x, (1, 0, 2)).reshape(T * B, I).astype(md)
    W_mm = W_cat.astype(md)

    def inv_spec(shape, imap):
        # Grid-invariant inputs: single-buffer to halve their VMEM footprint.
        if single_buffer_invariants:
            return pl.BlockSpec(shape, imap, pipeline_mode=pl.Buffered(1))
        return pl.BlockSpec(shape, imap)

    def kernel(x_ref, z_ref, zub_ref, w_ref, h_ref, c_ref):
        # One fused (i,f,g,o) matmul for all Tt timesteps in this block.
        gx = jnp.dot(x_ref[...], w_ref[...],
                     preferred_element_type=jnp.float32)        # (rows, 4Hp)
        gx = gx.reshape(Tt, B, 4 * Hp)
        zub_b = zub_ref[...]                                    # (2, B, 4Hp)
        z0 = z_ref[...]                                         # (2, B, Hp)

        def gate(k, act):
            sl = slice(k * Hp, (k + 1) * Hp)       # 128-aligned lane slice
            return act(gx[None, :, :, sl] + zub_b[:, None, :, sl])

        i = gate(0, jax.nn.sigmoid)
        f = gate(1, jax.nn.sigmoid)
        g = gate(2, jnp.tanh)
        o = gate(3, jax.nn.sigmoid)

        c = f * z0[:, None] + i * g                             # (2, Tt, B, Hp)
        h_ref[...] = (o * jnp.tanh(c)).astype(h_ref.dtype)
        # Per-block last-timestep c (grid axis is parallel -> no resident write).
        c_ref[...] = c[:, Tt - 1][None]                         # (1, 2, B, Hp)

    h_full, c_blocks = pl.pallas_call(
        kernel,
        out_shape=(jax.ShapeDtypeStruct((2, T, B, Hp), hd),
                   jax.ShapeDtypeStruct((nblk, 2, B, Hp), jnp.float32)),
        grid_spec=pltpu.PrefetchScalarGridSpec(
            num_scalar_prefetch=0,
            grid=(nblk,),
            in_specs=[
                pl.BlockSpec((rows, I), lambda t: (t, 0)),        # x (streamed)
                inv_spec((2, B, Hp), lambda t: (0, 0, 0)),        # z
                inv_spec((2, B, 4 * Hp), lambda t: (0, 0, 0)),    # (z@U)+b
                inv_spec((I, 4 * Hp), lambda t: (0, 0)),          # W_cat
            ],
            out_specs=[
                pl.BlockSpec((2, Tt, B, Hp), lambda t: (0, t, 0, 0)),  # h
                pl.BlockSpec((1, 2, B, Hp), lambda t: (t, 0, 0, 0)),   # last c / blk
            ],
        ),
        compiler_params=pltpu.CompilerParams(
            dimension_semantics=("parallel",),
            vmem_limit_bytes=int(vmem_budget),
        ),
    )(x2, z_p, zub, W_mm)

    outputs = h_full[..., :H]                     # (2, T, B, H): strip padding
    h_final = outputs[:, -1][None]                # (1, 2, B, H) == torch.stack([ht])
    c_final = c_blocks[-1, :, :, :H][None]        # (1, 2, B, H)
    return outputs, (h_final, c_final)


def lstm_reference(x, z, W_all, b_all, U_all):
    """Pure-JAX f32 reference mirroring the PyTorch loop (for verification)."""
    B, T, _ = x.shape
    H = z.shape[-1]
    z2 = z.reshape(2 * B, H)
    outs, c_last = [], None
    for t in range(T):
        xt = x[:, t, :]

        def gate(k, act):
            gx = xt @ W_all[k] + b_all[k]                  # (B, H)
            gz = (z2 @ U_all[k]).reshape(2, B, H)          # (2, B, H)
            return act(gx[None] + gz)

        i = gate(0, jax.nn.sigmoid)
        f = gate(1, jax.nn.sigmoid)
        g = gate(2, jnp.tanh)
        o = gate(3, jax.nn.sigmoid)
        c_next = f * z + i * g
        h_next = o * jnp.tanh(c_next)
        outs.append(h_next)
        c_last = c_next
    outputs = jnp.stack(outs, axis=1)
    return outputs, (outs[-1][None], c_last[None])


if __name__ == "__main__":
    B, T, I, H = 2, 8, 16, 32

    key = jax.random.PRNGKey(0)
    k_w, k_b, k_u, k_x, k_z, k_ctl = jax.random.split(key, 6)

    # Deterministic synthetic parameters (PyTorch Linear-style uniform ranges).
    sw = 1.0 / jnp.sqrt(jnp.float32(I))
    su = 1.0 / jnp.sqrt(jnp.float32(H))
    W_all = jax.random.uniform(k_w, (4, I, H), jnp.float32, -sw, sw)
    b_all = jax.random.uniform(k_b, (4, 1, H), jnp.float32, -sw, sw)
    U_all = jax.random.uniform(k_u, (4, H, H), jnp.float32, -su, su)
    packed = pack_lstm_params(W_all, b_all, U_all)

    x = jax.random.normal(k_x, (B, T, I), jnp.float32)    # (batch, seq, input)
    z = jax.random.normal(k_z, (2, B, H), jnp.float32)    # unpacked as (h0, c0)
    u = jax.random.normal(k_ctl, (B, T), jnp.float32)     # control input (unused: tau=None)

    ref_out, (ref_h, ref_c) = lstm_reference(x, z, W_all, b_all, U_all)

    def make_fwd(mm_dtype, h_dtype, single_buffer):
        return jax.jit(lambda x_, z_, u_: lstm_forward(
            x_, z_, u_, None, params=packed, matmul_dtype=mm_dtype,
            h_dtype=h_dtype, single_buffer_invariants=single_buffer))

    # 1) f32 matmul path: tight check against the pure-JAX reference.
    single_buffer = True
    try:
        out32, (h32, c32) = make_fwd(jnp.float32, jnp.float32, True)(x, z, u)
        jax.block_until_ready((out32, h32, c32))
    except Exception:
        # Fallback if this jax build rejects pipeline_mode=pl.Buffered(1).
        single_buffer = False
        out32, (h32, c32) = make_fwd(jnp.float32, jnp.float32, False)(x, z, u)
        jax.block_until_ready((out32, h32, c32))

    assert out32.shape == (2, T, B, H)
    assert h32.shape == (1, 2, B, H) and c32.shape == (1, 2, B, H)
    assert jnp.allclose(out32, ref_out, rtol=2e-3, atol=1e-4)
    assert jnp.allclose(h32, ref_h, rtol=2e-3, atol=1e-4)
    assert jnp.allclose(c32, ref_c, rtol=2e-3, atol=1e-4)

    # 2) bf16 matmul operands + bf16 h writeback (MXU-native, halves the
    #    dominant HBM traffic); activations / c / hoisted z@U stay f32.
    #    Deliberate precision tradeoff -> looser tolerance.
    outbf, (hbf, cbf) = make_fwd(jnp.bfloat16, jnp.bfloat16, single_buffer)(x, z, u)
    jax.block_until_ready((outbf, hbf, cbf))

    assert outbf.shape == (2, T, B, H) and outbf.dtype == jnp.bfloat16
    assert jnp.allclose(outbf.astype(jnp.float32), ref_out, rtol=3e-2, atol=3e-2)
    assert jnp.allclose(hbf.astype(jnp.float32), ref_h, rtol=3e-2, atol=3e-2)
    assert jnp.allclose(cbf, ref_c, rtol=3e-2, atol=3e-2)

    print("KERNEL_OK")
</pallas_src>

<mosaic_0001>
module attributes {stable_mosaic.version = 11 : i64} {
  func.func @kernel(%arg0: i32, %arg1: memref<16x16xf32, #tpu.memory_space<vmem>>, %arg2: memref<2x2x128xf32, #tpu.memory_space<vmem>>, %arg3: memref<2x2x512xf32, #tpu.memory_space<vmem>>, %arg4: memref<16x512xf32, #tpu.memory_space<vmem>>, %arg5: memref<2x8x2x128xf32, #tpu.memory_space<vmem>>, %arg6: memref<1x2x2x128xf32, #tpu.memory_space<vmem>>) attributes {dimension_semantics = [#tpu.dimension_semantics<parallel>], iteration_bounds = array<i64: 1>, scalar_prefetch = 0 : i64, scratch_operands = 0 : i64, tpu.core_type = #tpu.core_type<tc>, window_params = [{transform_indices = @transform_0, window_bounds = array<i64: 16, 16>}, {pipeline_mode = #tpu.pipeline_mode<synchronous>, transform_indices = @transform_1, window_bounds = array<i64: 2, 2, 128>}, {pipeline_mode = #tpu.pipeline_mode<synchronous>, transform_indices = @transform_2, window_bounds = array<i64: 2, 2, 512>}, {pipeline_mode = #tpu.pipeline_mode<synchronous>, transform_indices = @transform_3, window_bounds = array<i64: 16, 512>}, {transform_indices = @transform_4, window_bounds = array<i64: 2, 8, 2, 128>}, {transform_indices = @transform_5, window_bounds = array<i64: 1, 2, 2, 128>}]} {
    %c0 = arith.constant 0 : index
    %c0_0 = arith.constant 0 : index
    %0 = vector.load %arg1[%c0, %c0_0] : memref<16x16xf32, #tpu.memory_space<vmem>>, vector<16x16xf32>
    %c0_1 = arith.constant 0 : index
    %c0_2 = arith.constant 0 : index
    %1 = vector.load %arg4[%c0_1, %c0_2] : memref<16x512xf32, #tpu.memory_space<vmem>>, vector<16x512xf32>
    %cst = arith.constant dense<0.000000e+00> : vector<16x512xf32>
    %2 = tpu.matmul %0, %1, %cst {dimension_numbers = #tpu.dot_dimension_numbers<[1], [0], [0], [1], [0, 0, 1, 1], [], []>} : vector<16x16xf32>, vector<16x512xf32>, vector<16x512xf32> -> vector<16x512xf32>
    %3 = vector.shape_cast %2 : vector<16x512xf32> to vector<8x2x512xf32>
    %c0_3 = arith.constant 0 : index
    %c0_4 = arith.constant 0 : index
    %c0_5 = arith.constant 0 : index
    %4 = vector.load %arg3[%c0_3, %c0_4, %c0_5] : memref<2x2x512xf32, #tpu.memory_space<vmem>>, vector<2x2x512xf32>
    %c0_6 = arith.constant 0 : index
    %c0_7 = arith.constant 0 : index
    %c0_8 = arith.constant 0 : index
    %5 = vector.load %arg2[%c0_6, %c0_7, %c0_8] : memref<2x2x128xf32, #tpu.memory_space<vmem>>, vector<2x2x128xf32>
    %6 = vector.extract_strided_slice %3 {offsets = [0, 0, 0], sizes = [8, 2, 128], strides = [1, 1, 1]} : vector<8x2x512xf32> to vector<8x2x128xf32>
    %7 = vector.shape_cast %6 : vector<8x2x128xf32> to vector<1x8x2x128xf32>
    %8 = vector.extract_strided_slice %4 {offsets = [0, 0, 0], sizes = [2, 2, 128], strides = [1, 1, 1]} : vector<2x2x512xf32> to vector<2x2x128xf32>
    %9 = vector.shape_cast %8 : vector<2x2x128xf32> to vector<2x1x2x128xf32>
    %10 = vector.broadcast %7 : vector<1x8x2x128xf32> to vector<2x8x2x128xf32>
    %11 = vector.broadcast %9 : vector<2x1x2x128xf32> to vector<2x8x2x128xf32>
    %12 = arith.addf %10, %11 : vector<2x8x2x128xf32>
    %13 = arith.negf %12 : vector<2x8x2x128xf32>
    %14 = math.exp %13 : vector<2x8x2x128xf32>
    %cst_9 = arith.constant 1.000000e+00 : f32
    %15 = vector.broadcast %cst_9 : f32 to vector<2x8x2x128xf32>
    %16 = arith.addf %15, %14 : vector<2x8x2x128xf32>
    %17 = arith.divf %15, %16 : vector<2x8x2x128xf32>
    %18 = vector.extract_strided_slice %3 {offsets = [0, 0, 128], sizes = [8, 2, 128], strides = [1, 1, 1]} : vector<8x2x512xf32> to vector<8x2x128xf32>
    %19 = vector.shape_cast %18 : vector<8x2x128xf32> to vector<1x8x2x128xf32>
    %20 = vector.extract_strided_slice %4 {offsets = [0, 0, 128], sizes = [2, 2, 128], strides = [1, 1, 1]} : vector<2x2x512xf32> to vector<2x2x128xf32>
    %21 = vector.shape_cast %20 : vector<2x2x128xf32> to vector<2x1x2x128xf32>
    %22 = vector.broadcast %19 : vector<1x8x2x128xf32> to vector<2x8x2x128xf32>
    %23 = vector.broadcast %21 : vector<2x1x2x128xf32> to vector<2x8x2x128xf32>
    %24 = arith.addf %22, %23 : vector<2x8x2x128xf32>
    %25 = arith.negf %24 : vector<2x8x2x128xf32>
    %26 = math.exp %25 : vector<2x8x2x128xf32>
    %cst_10 = arith.constant 1.000000e+00 : f32
    %27 = vector.broadcast %cst_10 : f32 to vector<2x8x2x128xf32>
    %28 = arith.addf %27, %26 : vector<2x8x2x128xf32>
    %29 = arith.divf %27, %28 : vector<2x8x2x128xf32>
    %30 = vector.extract_strided_slice %3 {offsets = [0, 0, 256], sizes = [8, 2, 128], strides = [1, 1, 1]} : vector<8x2x512xf32> to vector<8x2x128xf32>
    %31 = vector.shape_cast %30 : vector<8x2x128xf32> to vector<1x8x2x128xf32>
    %32 = vector.extract_strided_slice %4 {offsets = [0, 0, 256], sizes = [2, 2, 128], strides = [1, 1, 1]} : vector<2x2x512xf32> to vector<2x2x128xf32>
    %33 = vector.shape_cast %32 : vector<2x2x128xf32> to vector<2x1x2x128xf32>
    %34 = vector.broadcast %31 : vector<1x8x2x128xf32> to vector<2x8x2x128xf32>
    %35 = vector.broadcast %33 : vector<2x1x2x128xf32> to vector<2x8x2x128xf32>
    %36 = arith.addf %34, %35 : vector<2x8x2x128xf32>
    %37 = math.tanh %36 : vector<2x8x2x128xf32>
    %38 = vector.extract_strided_slice %3 {offsets = [0, 0, 384], sizes = [8, 2, 128], strides = [1, 1, 1]} : vector<8x2x512xf32> to vector<8x2x128xf32>
    %39 = vector.shape_cast %38 : vector<8x2x128xf32> to vector<1x8x2x128xf32>
    %40 = vector.extract_strided_slice %4 {offsets = [0, 0, 384], sizes = [2, 2, 128], strides = [1, 1, 1]} : vector<2x2x512xf32> to vector<2x2x128xf32>
    %41 = vector.shape_cast %40 : vector<2x2x128xf32> to vector<2x1x2x128xf32>
    %42 = vector.broadcast %39 : vector<1x8x2x128xf32> to vector<2x8x2x128xf32>
    %43 = vector.broadcast %41 : vector<2x1x2x128xf32> to vector<2x8x2x128xf32>
    %44 = arith.addf %42, %43 : vector<2x8x2x128xf32>
    %45 = arith.negf %44 : vector<2x8x2x128xf32>
    %46 = math.exp %45 : vector<2x8x2x128xf32>
    %cst_11 = arith.constant 1.000000e+00 : f32
    %47 = vector.broadcast %cst_11 : f32 to vector<2x8x2x128xf32>
    %48 = arith.addf %47, %46 : vector<2x8x2x128xf32>
    %49 = arith.divf %47, %48 : vector<2x8x2x128xf32>
    %50 = vector.shape_cast %5 : vector<2x2x128xf32> to vector<2x1x2x128xf32>
    %51 = vector.broadcast %50 : vector<2x1x2x128xf32> to vector<2x8x2x128xf32>
    %52 = arith.mulf %29, %51 : vector<2x8x2x128xf32>
    %53 = arith.mulf %17, %37 : vector<2x8x2x128xf32>
    %54 = arith.addf %52, %53 : vector<2x8x2x128xf32>
    %55 = math.tanh %54 : vector<2x8x2x128xf32>
    %56 = arith.mulf %49, %55 : vector<2x8x2x128xf32>
    %c0_12 = arith.constant 0 : index
    %c0_13 = arith.constant 0 : index
    %c0_14 = arith.constant 0 : index
    %c0_15 = arith.constant 0 : index
    %57 = vector.load %arg5[%c0_12, %c0_13, %c0_14, %c0_15] : memref<2x8x2x128xf32, #tpu.memory_space<vmem>>, vector<2x8x2x128xf32>
    tpu.vector_store %arg5[%c0_12, %c0_13, %c0_14, %c0_15], %56 {strides = array<i32>} : memref<2x8x2x128xf32, #tpu.memory_space<vmem>>, vector<2x8x2x128xf32>,
    %58 = vector.extract_strided_slice %54 {offsets = [0, 7, 0, 0], sizes = [2, 1, 2, 128], strides = [1, 1, 1, 1]} : vector<2x8x2x128xf32> to vector<2x1x2x128xf32>
    %59 = vector.shape_cast %58 : vector<2x1x2x128xf32> to vector<2x2x128xf32>
    %60 = vector.shape_cast %59 : vector<2x2x128xf32> to vector<1x2x2x128xf32>
    %c0_16 = arith.constant 0 : index
    %c0_17 = arith.constant 0 : index
    %c0_18 = arith.constant 0 : index
    %c0_19 = arith.constant 0 : index
    %61 = vector.load %arg6[%c0_16, %c0_17, %c0_18, %c0_19] : memref<1x2x2x128xf32, #tpu.memory_space<vmem>>, vector<1x2x2x128xf32>
    tpu.vector_store %arg6[%c0_16, %c0_17, %c0_18, %c0_19], %60 {strides = array<i32>} : memref<1x2x2x128xf32, #tpu.memory_space<vmem>>, vector<1x2x2x128xf32>,
    return
  }
  func.func @transform_0(%arg0: i32) -> (i32, i32) {
    %c0_i32 = arith.constant 0 : i32
    %c0_i32_0 = arith.constant 0 : i32
    return %arg0, %c0_i32 : i32, i32
  }
  func.func @transform_1(%arg0: i32) -> (i32, i32, i32) {
    %c0_i32 = arith.constant 0 : i32
    %c0_i32_0 = arith.constant 0 : i32
    %c0_i32_1 = arith.constant 0 : i32
    %c0_i32_2 = arith.constant 0 : i32
    return %c0_i32, %c0_i32_0, %c0_i32_1 : i32, i32, i32
  }
  func.func @transform_2(%arg0: i32) -> (i32, i32, i32) {
    %c0_i32 = arith.constant 0 : i32
    %c0_i32_0 = arith.constant 0 : i32
    %c0_i32_1 = arith.constant 0 : i32
    %c0_i32_2 = arith.constant 0 : i32
    return %c0_i32, %c0_i32_0, %c0_i32_1 : i32, i32, i32
  }
  func.func @transform_3(%arg0: i32) -> (i32, i32) {
    %c0_i32 = arith.constant 0 : i32
    %c0_i32_0 = arith.constant 0 : i32
    %c0_i32_1 = arith.constant 0 : i32
    return %c0_i32, %c0_i32_0 : i32, i32
  }
  func.func @transform_4(%arg0: i32) -> (i32, i32, i32, i32) {
    %c0_i32 = arith.constant 0 : i32
    %c0_i32_0 = arith.constant 0 : i32
    %c0_i32_1 = arith.constant 0 : i32
    %c0_i32_2 = arith.constant 0 : i32
    return %c0_i32, %arg0, %c0_i32_0, %c0_i32_1 : i32, i32, i32, i32
  }
  func.func @transform_5(%arg0: i32) -> (i32, i32, i32, i32) {
    %c0_i32 = arith.constant 0 : i32
    %c0_i32_0 = arith.constant 0 : i32
    %c0_i32_1 = arith.constant 0 : i32
    %c0_i32_2 = arith.constant 0 : i32
    return %arg0, %c0_i32, %c0_i32_0, %c0_i32_1 : i32, i32, i32, i32
  }
}

module attributes {stable_mosaic.version = 11 : i64} {
  func.func @kernel(%arg0: i32, %arg1: memref<16x16xf32, #tpu.memory_space<vmem>>, %arg2: memref<2x2x128xf32, #tpu.memory_space<vmem>>, %arg3: memref<2x2x512xf32, #tpu.memory_space<vmem>>, %arg4: memref<16x512xf32, #tpu.memory_space<vmem>>, %arg5: memref<2x8x2x128xf32, #tpu.memory_space<vmem>>, %arg6: memref<1x2x2x128xf32, #tpu.memory_space<vmem>>) attributes {dimension_semantics = [#tpu.dimension_semantics<parallel>], iteration_bounds = array<i64: 1>, scalar_prefetch = 0 : i64, scratch_operands = 0 : i64, tpu.core_type = #tpu.core_type<tc>, window_params = [{transform_indices = @transform_0, window_bounds = array<i64: 16, 16>}, {pipeline_mode = #tpu.pipeline_mode<synchronous>, transform_indices = @transform_1, window_bounds = array<i64: 2, 2, 128>}, {pipeline_mode = #tpu.pipeline_mode<synchronous>, transform_indices = @transform_2, window_bounds = array<i64: 2, 2, 512>}, {pipeline_mode = #tpu.pipeline_mode<synchronous>, transform_indices = @transform_3, window_bounds = array<i64: 16, 512>}, {transform_indices = @transform_4, window_bounds = array<i64: 2, 8, 2, 128>}, {transform_indices = @transform_5, window_bounds = array<i64: 1, 2, 2, 128>}]} {
    %c0 = arith.constant 0 : index
    %c0_0 = arith.constant 0 : index
    %0 = vector.load %arg1[%c0, %c0_0] : memref<16x16xf32, #tpu.memory_space<vmem>>, vector<16x16xf32>
    %c0_1 = arith.constant 0 : index
    %c0_2 = arith.constant 0 : index
    %1 = vector.load %arg4[%c0_1, %c0_2] : memref<16x512xf32, #tpu.memory_space<vmem>>, vector<16x512xf32>
    %cst = arith.constant dense<0.000000e+00> : vector<16x512xf32>
    %2 = tpu.matmul %0, %1, %cst {dimension_numbers = #tpu.dot_dimension_numbers<[1], [0], [0], [1], [0, 0, 1, 1], [], []>} : vector<16x16xf32>, vector<16x512xf32>, vector<16x512xf32> -> vector<16x512xf32>
    %3 = vector.shape_cast %2 : vector<16x512xf32> to vector<8x2x512xf32>
    %c0_3 = arith.constant 0 : index
    %c0_4 = arith.constant 0 : index
    %c0_5 = arith.constant 0 : index
    %4 = vector.load %arg3[%c0_3, %c0_4, %c0_5] : memref<2x2x512xf32, #tpu.memory_space<vmem>>, vector<2x2x512xf32>
    %c0_6 = arith.constant 0 : index
    %c0_7 = arith.constant 0 : index
    %c0_8 = arith.constant 0 : index
    %5 = vector.load %arg2[%c0_6, %c0_7, %c0_8] : memref<2x2x128xf32, #tpu.memory_space<vmem>>, vector<2x2x128xf32>
    %6 = vector.extract_strided_slice %3 {offsets = [0, 0, 0], sizes = [8, 2, 128], strides = [1, 1, 1]} : vector<8x2x512xf32> to vector<8x2x128xf32>
    %7 = vector.shape_cast %6 : vector<8x2x128xf32> to vector<1x8x2x128xf32>
    %8 = vector.extract_strided_slice %4 {offsets = [0, 0, 0], sizes = [2, 2, 128], strides = [1, 1, 1]} : vector<2x2x512xf32> to vector<2x2x128xf32>
    %9 = vector.shape_cast %8 : vector<2x2x128xf32> to vector<2x1x2x128xf32>
    %10 = vector.broadcast %7 : vector<1x8x2x128xf32> to vector<2x8x2x128xf32>
    %11 = vector.broadcast %9 : vector<2x1x2x128xf32> to vector<2x8x2x128xf32>
    %12 = arith.addf %10, %11 : vector<2x8x2x128xf32>
    %13 = arith.negf %12 : vector<2x8x2x128xf32>
    %14 = math.exp %13 : vector<2x8x2x128xf32>
    %cst_9 = arith.constant 1.000000e+00 : f32
    %15 = vector.broadcast %cst_9 : f32 to vector<2x8x2x128xf32>
    %16 = arith.addf %15, %14 : vector<2x8x2x128xf32>
    %17 = arith.divf %15, %16 : vector<2x8x2x128xf32>
    %18 = vector.extract_strided_slice %3 {offsets = [0, 0, 128], sizes = [8, 2, 128], strides = [1, 1, 1]} : vector<8x2x512xf32> to vector<8x2x128xf32>
    %19 = vector.shape_cast %18 : vector<8x2x128xf32> to vector<1x8x2x128xf32>
    %20 = vector.extract_strided_slice %4 {offsets = [0, 0, 128], sizes = [2, 2, 128], strides = [1, 1, 1]} : vector<2x2x512xf32> to vector<2x2x128xf32>
    %21 = vector.shape_cast %20 : vector<2x2x128xf32> to vector<2x1x2x128xf32>
    %22 = vector.broadcast %19 : vector<1x8x2x128xf32> to vector<2x8x2x128xf32>
    %23 = vector.broadcast %21 : vector<2x1x2x128xf32> to vector<2x8x2x128xf32>
    %24 = arith.addf %22, %23 : vector<2x8x2x128xf32>
    %25 = arith.negf %24 : vector<2x8x2x128xf32>
    %26 = math.exp %25 : vector<2x8x2x128xf32>
    %cst_10 = arith.constant 1.000000e+00 : f32
    %27 = vector.broadcast %cst_10 : f32 to vector<2x8x2x128xf32>
    %28 = arith.addf %27, %26 : vector<2x8x2x128xf32>
    %29 = arith.divf %27, %28 : vector<2x8x2x128xf32>
    %30 = vector.extract_strided_slice %3 {offsets = [0, 0, 256], sizes = [8, 2, 128], strides = [1, 1, 1]} : vector<8x2x512xf32> to vector<8x2x128xf32>
    %31 = vector.shape_cast %30 : vector<8x2x128xf32> to vector<1x8x2x128xf32>
    %32 = vector.extract_strided_slice %4 {offsets = [0, 0, 256], sizes = [2, 2, 128], strides = [1, 1, 1]} : vector<2x2x512xf32> to vector<2x2x128xf32>
    %33 = vector.shape_cast %32 : vector<2x2x128xf32> to vector<2x1x2x128xf32>
    %34 = vector.broadcast %31 : vector<1x8x2x128xf32> to vector<2x8x2x128xf32>
    %35 = vector.broadcast %33 : vector<2x1x2x128xf32> to vector<2x8x2x128xf32>
    %36 = arith.addf %34, %35 : vector<2x8x2x128xf32>
    %37 = math.tanh %36 : vector<2x8x2x128xf32>
    %38 = vector.extract_strided_slice %3 {offsets = [0, 0, 384], sizes = [8, 2, 128], strides = [1, 1, 1]} : vector<8x2x512xf32> to vector<8x2x128xf32>
    %39 = vector.shape_cast %38 : vector<8x2x128xf32> to vector<1x8x2x128xf32>
    %40 = vector.extract_strided_slice %4 {offsets = [0, 0, 384], sizes = [2, 2, 128], strides = [1, 1, 1]} : vector<2x2x512xf32> to vector<2x2x128xf32>
    %41 = vector.shape_cast %40 : vector<2x2x128xf32> to vector<2x1x2x128xf32>
    %42 = vector.broadcast %39 : vector<1x8x2x128xf32> to vector<2x8x2x128xf32>
    %43 = vector.broadcast %41 : vector<2x1x2x128xf32> to vector<2x8x2x128xf32>
    %44 = arith.addf %42, %43 : vector<2x8x2x128xf32>
    %45 = arith.negf %44 : vector<2x8x2x128xf32>
    %46 = math.exp %45 : vector<2x8x2x128xf32>
    %cst_11 = arith.constant 1.000000e+00 : f32
    %47 = vector.broadcast %cst_11 : f32 to vector<2x8x2x128xf32>
    %48 = arith.addf %47, %46 : vector<2x8x2x128xf32>
    %49 = arith.divf %47, %48 : vector<2x8x2x128xf32>
    %50 = vector.shape_cast %5 : vector<2x2x128xf32> to vector<2x1x2x128xf32>
    %51 = vector.broadcast %50 : vector<2x1x2x128xf32> to vector<2x8x2x128xf32>
    %52 = arith.mulf %29, %51 : vector<2x8x2x128xf32>
    %53 = arith.mulf %17, %37 : vector<2x8x2x128xf32>
    %54 = arith.addf %52, %53 : vector<2x8x2x128xf32>
    %55 = math.tanh %54 : vector<2x8x2x128xf32>
    %56 = arith.mulf %49, %55 : vector<2x8x2x128xf32>
    %c0_12 = arith.constant 0 : index
    %c0_13 = arith.constant 0 : index
    %c0_14 = arith.constant 0 : index
    %c0_15 = arith.constant 0 : index
    %57 = vector.load %arg5[%c0_12, %c0_13, %c0_14, %c0_15] : memref<2x8x2x128xf32, #tpu.memory_space<vmem>>, vector<2x8x2x128xf32>
    tpu.vector_store %arg5[%c0_12, %c0_13, %c0_14, %c0_15], %56 {strides = array<i32>} : memref<2x8x2x128xf32, #tpu.memory_space<vmem>>, vector<2x8x2x128xf32>,
    %58 = vector.extract_strided_slice %54 {offsets = [0, 7, 0, 0], sizes = [2, 1, 2, 128], strides = [1, 1, 1, 1]} : vector<2x8x2x128xf32> to vector<2x1x2x128xf32>
    %59 = vector.shape_cast %58 : vector<2x1x2x128xf32> to vector<2x2x128xf32>
    %60 = vector.shape_cast %59 : vector<2x2x128xf32> to vector<1x2x2x128xf32>
    %c0_16 = arith.constant 0 : index
    %c0_17 = arith.constant 0 : index
    %c0_18 = arith.constant 0 : index
    %c0_19 = arith.constant 0 : index
    %61 = vector.load %arg6[%c0_16, %c0_17, %c0_18, %c0_19] : memref<1x2x2x128xf32, #tpu.memory_space<vmem>>, vector<1x2x2x128xf32>
    tpu.vector_store %arg6[%c0_16, %c0_17, %c0_18, %c0_19], %60 {strides = array<i32>} : memref<1x2x2x128xf32, #tpu.memory_space<vmem>>, vector<1x2x2x128xf32>,
    return
  }
  func.func @transform_0(%arg0: i32) -> (i32, i32) {
    %c0_i32 = arith.constant 0 : i32
    %c0_i32_0 = arith.constant 0 : i32
    return %arg0, %c0_i32 : i32, i32
  }
  func.func @transform_1(%arg0: i32) -> (i32, i32, i32) {
    %c0_i32 = arith.constant 0 : i32
    %c0_i32_0 = arith.constant 0 : i32
    %c0_i32_1 = arith.constant 0 : i32
    %c0_i32_2 = arith.constant 0 : i32
    return %c0_i32, %c0_i32_0, %c0_i32_1 : i32, i32, i32
  }
  func.func @transform_2(%arg0: i32) -> (i32, i32, i32) {
    %c0_i32 = arith.constant 0 : i32
    %c0_i32_0 = arith.constant 0 : i32
    %c0_i32_1 = arith.constant 0 : i32
    %c0_i32_2 = arith.constant 0 : i32
    return %c0_i32, %c0_i32_0, %c0_i32_1 : i32, i32, i32
  }
  func.func @transform_3(%arg0: i32) -> (i32, i32) {
    %c0_i32 = arith.constant 0 : i32
    %c0_i32_0 = arith.constant 0 : i32
    %c0_i32_1 = arith.constant 0 : i32
    return %c0_i32, %c0_i32_0 : i32, i32
  }
  func.func @transform_4(%arg0: i32) -> (i32, i32, i32, i32) {
    %c0_i32 = arith.constant 0 : i32
    %c0_i32_0 = arith.constant 0 : i32
    %c0_i32_1 = arith.constant 0 : i32
    %c0_i32_2 = arith.constant 0 : i32
    return %c0_i32, %arg0, %c0_i32_0, %c0_i32_1 : i32, i32, i32, i32
  }
  func.func @transform_5(%arg0: i32) -> (i32, i32, i32, i32) {
    %c0_i32 = arith.constant 0 : i32
    %c0_i32_0 = arith.constant 0 : i32
    %c0_i32_1 = arith.constant 0 : i32
    %c0_i32_2 = arith.constant 0 : i32
    return %arg0, %c0_i32, %c0_i32_0, %c0_i32_1 : i32, i32, i32, i32
  }
}

</mosaic_0001>

<llo_original>
// kernel: _lambda_.1
$region0: #{_lambda_.1}
  #allocation0 [shape = 'u32[]', space=smem, size = 0x4, offset = 0x4, fixed_abs, tag = 'smem constant byte address 0x4 - core index']
  #allocation1 [shape = 'u32[144,128]{1,0:T(1,128)}', space=vmem, size = 0x12000, scoped, tag = 'internal scratch']
  %s0 = inlined_call_operand.vmem [shape: f32[16,16], index: 0, kind: input, shape index: {}]
  %s1 = inlined_call_operand.vmem [shape: f32[2,2,128], index: 1, kind: input, shape index: {}]
  %s2 = inlined_call_operand.vmem [shape: f32[2,2,512], index: 2, kind: input, shape index: {}]
  %s3 = inlined_call_operand.vmem [shape: f32[16,512], index: 3, kind: input, shape index: {}]
  %s4 = inlined_call_operand.vmem [shape: f32[2,8,2,128], index: 4, kind: output, shape index: {0}]
  %s5 = inlined_call_operand.hbm [shape: f32[1,2,2,128], index: 5, kind: output, shape index: {1}]
  %6 = xla_tuple %s4, %s5
  %s7 = sld [smem:[#allocation0]]
  $region34: #{_lambda_.1} parent=0
    _
  %s9 = ssub.s32 1, %s7
  %s10 = scalar_select 0, %s9, %s7
  $region1: #{_lambda_.1} parent=0
    #allocation2 [shape = 'u8[2048]{0}', space=vmem, size = 0x800, scoped, tag = 'output window, operand 1, single buffered']
    #allocation3 [shape = 's32[1]{0}', space=sflag, size = 0x4, scoped, tag = 'scoped memory for _lambda_.1']
    %11 = vsyncpa [#allocation3], 0
    // Predicated region
    $region2: #{_lambda_.1} parent=1 // pred_check
      _
    $region3: #{_lambda_.1} parent=1 // pred_check_branch
      %13 = sbr.rel (0) target = $region5
    $region4: #{_lambda_.1} parent=1 // pred_region
      _
    $region5: #{_lambda_.1} parent=1 // pred_fallthru
      _
    // Predicated region
    $region6: #{_lambda_.1} parent=1 // pred_check
      _
    $region7: #{_lambda_.1} parent=1 // pred_check_branch
      %15 = sbr.rel (0) target = $region9
    $region8: #{_lambda_.1} parent=1 // pred_region
      _
    $region9: #{_lambda_.1} parent=1 // pred_fallthru
      _
    // Predicated region
    $region10: #{_lambda_.1} parent=1 // pred_check
      _
    $region11: #{_lambda_.1} parent=1 // pred_check_branch
      %17 = sbr.rel (0) target = $region13
    $region12: #{_lambda_.1} parent=1 // pred_region
      _
    $region13: #{_lambda_.1} parent=1 // pred_fallthru
      _
    // Predicated region
    $region14: #{_lambda_.1} parent=1 // pred_check
      _
    $region15: #{_lambda_.1} parent=1 // pred_check_branch
      %19 = sbr.rel (0) target = $region17
    $region16: #{_lambda_.1} parent=1 // pred_region
      _
    $region17: #{_lambda_.1} parent=1 // pred_fallthru
      _
    %v20 = vld [vmem:[%s0] sm:$0xff]
    %v21 = vld [vmem:[%s0 + $0x8] sm:$0xff]
    %v22 = vld [vmem:[%s3] sm:$0xff]
    %v23 = vld [vmem:[%s3 + $0x8] sm:$0xff]
    %v24 = vld [vmem:[%s3 + $0x10] sm:$0xff]
    %v25 = vld [vmem:[%s3 + $0x18] sm:$0xff]
    %v26 = vld [vmem:[%s3 + $0x20] sm:$0xff]
    %v27 = vld [vmem:[%s3 + $0x28] sm:$0xff]
    %v28 = vld [vmem:[%s3 + $0x30] sm:$0xff]
    %v29 = vld [vmem:[%s3 + $0x38] sm:$0xff]
    %vm30 = vcmask 130048
    %v32 = vsel %vm30, %v20, 0
    %v35 = vsel %vm30, %v21, 0
    %37 = vmatprep.subr.mxu0 0.0
    %38 = vmatpush1.msra.mxu0 0.0
    %39 = vmatprep.subr.mxu0 0.0
    %40 = vmatpush1.msra.mxu0 0.0
    %41 = vmatprep.subr.mxu0 0.0
    %42 = vmatpush1.msra.mxu0 0.0
    %43 = vmatprep.subr.mxu0 0.0
    %44 = vmatpush1.msra.mxu0 0.0
    %45 = vmatprep.subr.mxu0 0.0
    %46 = vmatpush1.msra.mxu0 0.0
    %47 = vmatprep.subr.mxu0 0.0
    %48 = vmatpush1.msra.mxu0 0.0
    %49 = vmatprep.subr.mxu0 0.0
    %50 = vmatpush1.msra.mxu0 0.0
    %51 = vmatprep.subr.mxu0 0.0
    %52 = vmatpush1.msra.mxu0 0.0
    %53 = vmatprep.subr.mxu0 0.0
    %54 = vmatpush1.msra.mxu0 0.0
    %55 = vmatprep.subr.mxu0 0.0
    %56 = vmatpush1.msra.mxu0 0.0
    %57 = vmatprep.subr.mxu0 0.0
    %58 = vmatpush1.msra.mxu0 0.0
    %59 = vmatprep.subr.mxu0 0.0
    %60 = vmatpush1.msra.mxu0 0.0
    %61 = vmatprep.subr.mxu0 0.0
    %62 = vmatpush1.msra.mxu0 0.0
    %63 = vmatprep.subr.mxu0 0.0
    %64 = vmatpush1.msra.mxu0 0.0
    %65 = vmatprep.subr.mxu0 %v27
    %66 = vmatpush1.msra.mxu0 %v26
    %67 = vmatprep.subr.mxu0 %v23
    %68 = vmatpush1.msra.mxu0 %v22
    %69 = vmatprep.subr.mxu0 0.0
    %70 = vmatpush2.msra.mxu0 0.0
    %71 = vmatprep.subr.mxu0 0.0
    %72 = vmatpush2.msra.mxu0 0.0
    %73 = vmatprep.subr.mxu0 0.0
    %74 = vmatpush2.msra.mxu0 0.0
    %75 = vmatprep.subr.mxu0 0.0
    %76 = vmatpush2.msra.mxu0 0.0
    %77 = vmatprep.subr.mxu0 0.0
    %78 = vmatpush2.msra.mxu0 0.0
    %79 = vmatprep.subr.mxu0 0.0
    %80 = vmatpush2.msra.mxu0 0.0
    %81 = vmatprep.subr.mxu0 0.0
    %82 = vmatpush2.msra.mxu0 0.0
    %83 = vmatprep.subr.mxu0 0.0
    %84 = vmatpush2.msra.mxu0 0.0
    %85 = vmatprep.subr.mxu0 0.0
    %86 = vmatpush2.msra.mxu0 0.0
    %87 = vmatprep.subr.mxu0 0.0
    %88 = vmatpush2.msra.mxu0 0.0
    %89 = vmatprep.subr.mxu0 0.0
    %90 = vmatpush2.msra.mxu0 0.0
    %91 = vmatprep.subr.mxu0 0.0
    %92 = vmatpush2.msra.mxu0 0.0
    %93 = vmatprep.subr.mxu0 0.0
    %94 = vmatpush2.msra.mxu0 0.0
    %95 = vmatprep.subr.mxu0 0.0
    %96 = vmatpush2.msra.mxu0 0.0
    %97 = vmatprep.subr.mxu0 0.0
    %98 = vmatpush2.msra.mxu0 0.0
    %99 = vmatprep.subr.mxu0 0.0
    %100 = vmatpush2.msra.mxu0 0.0
    %101 = vmatprep.mubr.f32.mxu0 0.0
    %102 = vmatmul.mubr.f32.gmra.mxu0 %v32
    %v103 = vpop.f32.mrf.mxu0
    %v104 = vadd.f32 0.0, %v103
    %v105 = vpop.f32.mrf.mxu0
    %v106 = vadd.f32 0.0, %v105
    %107 = vmatprep.mubr.f32.mxu0 0.0
    %108 = vmatmul.mubr.f32.gmra.mxu0 %v35
    %v109 = vpop.f32.mrf.mxu0
    %v110 = vadd.f32 0.0, %v109
    %v111 = vpop.f32.mrf.mxu0
    %v112 = vadd.f32 0.0, %v111
    %113 = vdwg.mxu0
    %114 = vmatprep.subr.mxu0 0.0
    %115 = vmatpush1.msra.mxu0 0.0
    %116 = vmatprep.subr.mxu0 0.0
    %117 = vmatpush1.msra.mxu0 0.0
    %118 = vmatprep.subr.mxu0 0.0
    %119 = vmatpush1.msra.mxu0 0.0
    %120 = vmatprep.subr.mxu0 0.0
    %121 = vmatpush1.msra.mxu0 0.0
    %122 = vmatprep.subr.mxu0 0.0
    %123 = vmatpush1.msra.mxu0 0.0
    %124 = vmatprep.subr.mxu0 0.0
    %125 = vmatpush1.msra.mxu0 0.0
    %126 = vmatprep.subr.mxu0 0.0
    %127 = vmatpush1.msra.mxu0 0.0
    %128 = vmatprep.subr.mxu0 0.0
    %129 = vmatpush1.msra.mxu0 0.0
    %130 = vmatprep.subr.mxu0 0.0
    %131 = vmatpush1.msra.mxu0 0.0
    %132 = vmatprep.subr.mxu0 0.0
    %133 = vmatpush1.msra.mxu0 0.0
    %134 = vmatprep.subr.mxu0 0.0
    %135 = vmatpush1.msra.mxu0 0.0
    %136 = vmatprep.subr.mxu0 0.0
    %137 = vmatpush1.msra.mxu0 0.0
    %138 = vmatprep.subr.mxu0 0.0
    %139 = vmatpush1.msra.mxu0 0.0
    %140 = vmatprep.subr.mxu0 0.0
    %141 = vmatpush1.msra.mxu0 0.0
    %142 = vmatprep.subr.mxu0 %v29
    %143 = vmatpush1.msra.mxu0 %v28
    %144 = vmatprep.subr.mxu0 %v25
    %145 = vmatpush1.msra.mxu0 %v24
    %146 = vmatprep.subr.mxu0 0.0
    %147 = vmatpush2.msra.mxu0 0.0
    %148 = vmatprep.subr.mxu0 0.0
    %149 = vmatpush2.msra.mxu0 0.0
    %150 = vmatprep.subr.mxu0 0.0
    %151 = vmatpush2.msra.mxu0 0.0
    %152 = vmatprep.subr.mxu0 0.0
    %153 = vmatpush2.msra.mxu0 0.0
    %154 = vmatprep.subr.mxu0 0.0
    %155 = vmatpush2.msra.mxu0 0.0
    %156 = vmatprep.subr.mxu0 0.0
    %157 = vmatpush2.msra.mxu0 0.0
    %158 = vmatprep.subr.mxu0 0.0
    %159 = vmatpush2.msra.mxu0 0.0
    %160 = vmatprep.subr.mxu0 0.0
    %161 = vmatpush2.msra.mxu0 0.0
    %162 = vmatprep.subr.mxu0 0.0
    %163 = vmatpush2.msra.mxu0 0.0
    %164 = vmatprep.subr.mxu0 0.0
    %165 = vmatpush2.msra.mxu0 0.0
    %166 = vmatprep.subr.mxu0 0.0
    %167 = vmatpush2.msra.mxu0 0.0
    %168 = vmatprep.subr.mxu0 0.0
    %169 = vmatpush2.msra.mxu0 0.0
    %170 = vmatprep.subr.mxu0 0.0
    %171 = vmatpush2.msra.mxu0 0.0
    %172 = vmatprep.subr.mxu0 0.0
    %173 = vmatpush2.msra.mxu0 0.0
    %174 = vmatprep.subr.mxu0 0.0
    %175 = vmatpush2.msra.mxu0 0.0
    %176 = vmatprep.subr.mxu0 0.0
    %177 = vmatpush2.msra.mxu0 0.0
    %178 = vmatprep.mubr.f32.mxu0 0.0
    %179 = vmatmul.mubr.f32.gmra.mxu0 %v32
    %v180 = vpop.f32.mrf.mxu0
    %v181 = vadd.f32 0.0, %v180
    %v182 = vpop.f32.mrf.mxu0
    %v183 = vadd.f32 0.0, %v182
    %184 = vmatprep.mubr.f32.mxu0 0.0
    %185 = vmatmul.mubr.f32.gmra.mxu0 %v35
    %v186 = vpop.f32.mrf.mxu0
    %v187 = vadd.f32 0.0, %v186
    %v188 = vpop.f32.mrf.mxu0
    %v189 = vadd.f32 0.0, %v188
    %190 = vdwg.mxu0
    %v199 = vcombine.low %v104, %v106
    %v200 = vcombine.high %v104, %v106
    %v201 = vcombine.low %v181, %v183
    %v202 = vcombine.high %v181, %v183
    %v204 = vunpack.c.l.s4 1983009808
    %v205 = vunpack.c.0.s8 %v204
    %v206 = vlaneseq
    %v207 = vshrl.u32 %v206, 7
    %v208 = vsub.s32 %v205, %v207
    %v209 = vrot.slane %v199, %v208
    %v211 = vunpack.c.l.s4 1983009808
    %v212 = vunpack.c.0.s8 %v211
    %v213 = vlaneseq
    %v214 = vshrl.u32 %v213, 7
    %v215 = vsub.s32 %v212, %v214
    %v216 = vrot.slane %v200, %v215
    %v218 = vunpack.c.l.s4 1983009808
    %v219 = vunpack.c.0.s8 %v218
    %v220 = vlaneseq
    %v221 = vshrl.u32 %v220, 7
    %v222 = vsub.s32 %v219, %v221
    %v223 = vrot.slane %v201, %v222
    %v225 = vunpack.c.l.s4 1983009808
    %v226 = vunpack.c.0.s8 %v225
    %v227 = vlaneseq
    %v228 = vshrl.u32 %v227, 7
    %v229 = vsub.s32 %v226, %v228
    %v230 = vrot.slane %v202, %v229
    %v231 = vcombine.low %v209, %v223
    %v232 = vcombine.high %v209, %v223
    %v233 = vcombine.low %v216, %v230
    %v234 = vcombine.high %v216, %v230
    %v235 = vcombine.low %v110, %v112
    %v236 = vcombine.high %v110, %v112
    %v237 = vcombine.low %v187, %v189
    %v238 = vcombine.high %v187, %v189
    %v240 = vunpack.c.l.s4 1983009808
    %v241 = vunpack.c.0.s8 %v240
    %v242 = vlaneseq
    %v243 = vshrl.u32 %v242, 7
    %v244 = vsub.s32 %v241, %v243
    %v245 = vrot.slane %v235, %v244
    %v247 = vunpack.c.l.s4 1983009808
    %v248 = vunpack.c.0.s8 %v247
    %v249 = vlaneseq
    %v250 = vshrl.u32 %v249, 7
    %v251 = vsub.s32 %v248, %v250
    %v252 = vrot.slane %v236, %v251
    %v254 = vunpack.c.l.s4 1983009808
    %v255 = vunpack.c.0.s8 %v254
    %v256 = vlaneseq
    %v257 = vshrl.u32 %v256, 7
    %v258 = vsub.s32 %v255, %v257
    %v259 = vrot.slane %v237, %v258
    %v261 = vunpack.c.l.s4 1983009808
    %v262 = vunpack.c.0.s8 %v261
    %v263 = vlaneseq
    %v264 = vshrl.u32 %v263, 7
    %v265 = vsub.s32 %v262, %v264
    %v266 = vrot.slane %v238, %v265
    %v267 = vcombine.low %v245, %v259
    %v268 = vcombine.high %v245, %v259
    %v269 = vcombine.low %v252, %v266
    %v270 = vcombine.high %v252, %v266
    %v279 = vld [vmem:[%s2] sm:$0xff]
    %v280 = vld [vmem:[%s2 + $0x8] sm:$0xff]
    %v281 = vld [vmem:[%s1] sm:$0x3]
    %v282 = vld [vmem:[%s1 + $0x2] sm:$0x3]
    %v283 = vadd.f32 %v231, %v279
    %v284 = vadd.f32 %v232, %v279
    %v285 = vadd.f32 %v233, %v279
    %v286 = vadd.f32 %v234, %v279
    %v287 = vadd.f32 %v267, %v279
    %v288 = vadd.f32 %v268, %v279
    %v289 = vadd.f32 %v269, %v279
    %v290 = vadd.f32 %v270, %v279
    %v291 = vadd.f32 %v231, %v280
    %v292 = vadd.f32 %v232, %v280
    %v293 = vadd.f32 %v233, %v280
    %v294 = vadd.f32 %v234, %v280
    %v295 = vadd.f32 %v267, %v280
    %v296 = vadd.f32 %v268, %v280
    %v297 = vadd.f32 %v269, %v280
    %v298 = vadd.f32 %v270, %v280
    %v299 = vxor.u32 %v283, 2147483648
    %v300 = vxor.u32 %v284, 2147483648
    %v301 = vxor.u32 %v285, 2147483648
    %v302 = vxor.u32 %v286, 2147483648
    %v303 = vxor.u32 %v287, 2147483648
    %v304 = vxor.u32 %v288, 2147483648
    %v305 = vxor.u32 %v289, 2147483648
    %v306 = vxor.u32 %v290, 2147483648
    %v307 = vxor.u32 %v291, 2147483648
    %v308 = vxor.u32 %v292, 2147483648
    %v309 = vxor.u32 %v293, 2147483648
    %v310 = vxor.u32 %v294, 2147483648
    %v311 = vxor.u32 %v295, 2147483648
    %v312 = vxor.u32 %v296, 2147483648
    %v313 = vxor.u32 %v297, 2147483648
    %v314 = vxor.u32 %v298, 2147483648
    %v315 = vmul.f32 %v299, 1.442695
    %v316 = vpow.pop %v315
    %v317 = vmul.f32 %v300, 1.442695
    %v318 = vpow.pop %v317
    %v319 = vmul.f32 %v301, 1.442695
    %v320 = vpow.pop %v319
    %v321 = vmul.f32 %v302, 1.442695
    %v322 = vpow.pop %v321
    %v323 = vmul.f32 %v303, 1.442695
    %v324 = vpow.pop %v323
    %v325 = vmul.f32 %v304, 1.442695
    %v326 = vpow.pop %v325
    %v327 = vmul.f32 %v305, 1.442695
    %v328 = vpow.pop %v327
    %v329 = vmul.f32 %v306, 1.442695
    %v330 = vpow.pop %v329
    %v331 = vmul.f32 %v307, 1.442695
    %v332 = vpow.pop %v331
    %v333 = vmul.f32 %v308, 1.442695
    %v334 = vpow.pop %v333
    %v335 = vmul.f32 %v309, 1.442695
    %v336 = vpow.pop %v335
    %v337 = vmul.f32 %v310, 1.442695
    %v338 = vpow.pop %v337
    %v339 = vmul.f32 %v311, 1.442695
    %v340 = vpow.pop %v339
    %v341 = vmul.f32 %v312, 1.442695
    %v342 = vpow.pop %v341
    %v343 = vmul.f32 %v313, 1.442695
    %v344 = vpow.pop %v343
    %v345 = vmul.f32 %v314, 1.442695
    %v346 = vpow.pop %v345
    %v347 = vadd.f32 %v316, 1.0
    %v348 = vadd.f32 %v318, 1.0
    %v349 = vadd.f32 %v320, 1.0
    %v350 = vadd.f32 %v322, 1.0
    %v351 = vadd.f32 %v324, 1.0
    %v352 = vadd.f32 %v326, 1.0
    %v353 = vadd.f32 %v328, 1.0
    %v354 = vadd.f32 %v330, 1.0
    %v355 = vadd.f32 %v332, 1.0
    %v356 = vadd.f32 %v334, 1.0
    %v357 = vadd.f32 %v336, 1.0
    %v358 = vadd.f32 %v338, 1.0
    %v359 = vadd.f32 %v340, 1.0
    %v360 = vadd.f32 %v342, 1.0
    %v361 = vadd.f32 %v344, 1.0
    %v362 = vadd.f32 %v346, 1.0
    %v363 = vrcp.pop %v347
    %v364 = vmul.f32 1.0, %v363
    %v365 = vrcp.pop %v348
    %v366 = vmul.f32 1.0, %v365
    %v367 = vrcp.pop %v349
    %v368 = vmul.f32 1.0, %v367
    %v369 = vrcp.pop %v350
    %v370 = vmul.f32 1.0, %v369
    %v371 = vrcp.pop %v351
    %v372 = vmul.f32 1.0, %v371
    %v373 = vrcp.pop %v352
    %v374 = vmul.f32 1.0, %v373
    %v375 = vrcp.pop %v353
    %v376 = vmul.f32 1.0, %v375
    %v377 = vrcp.pop %v354
    %v378 = vmul.f32 1.0, %v377
    %v379 = vrcp.pop %v355
    %v380 = vmul.f32 1.0, %v379
    %v381 = vrcp.pop %v356
    %v382 = vmul.f32 1.0, %v381
    %v383 = vrcp.pop %v357
    %v384 = vmul.f32 1.0, %v383
    %v385 = vrcp.pop %v358
    %v386 = vmul.f32 1.0, %v385
    %v387 = vrcp.pop %v359
    %v388 = vmul.f32 1.0, %v387
    %v389 = vrcp.pop %v360
    %v390 = vmul.f32 1.0, %v389
    %v391 = vrcp.pop %v361
    %v392 = vmul.f32 1.0, %v391
    %v393 = vrcp.pop %v362
    %v394 = vmul.f32 1.0, %v393
    %v397 = vrot.slane %v279, 2
    %v398 = vrot.slane %v280, 2
    %v401 = vrot.slane %v231, 2
    %v402 = vrot.slane %v232, 2
    %v403 = vrot.slane %v233, 2
    %v404 = vrot.slane %v234, 2
    %v405 = vrot.slane %v267, 2
    %v406 = vrot.slane %v268, 2
    %v407 = vrot.slane %v269, 2
    %v408 = vrot.slane %v270, 2
    %v417 = vadd.f32 %v401, %v397
    %v418 = vadd.f32 %v402, %v397
    %v419 = vadd.f32 %v403, %v397
    %v420 = vadd.f32 %v404, %v397
    %v421 = vadd.f32 %v405, %v397
    %v422 = vadd.f32 %v406, %v397
    %v423 = vadd.f32 %v407, %v397
    %v424 = vadd.f32 %v408, %v397
    %v425 = vadd.f32 %v401, %v398
    %v426 = vadd.f32 %v402, %v398
    %v427 = vadd.f32 %v403, %v398
    %v428 = vadd.f32 %v404, %v398
    %v429 = vadd.f32 %v405, %v398
    %v430 = vadd.f32 %v406, %v398
    %v431 = vadd.f32 %v407, %v398
    %v432 = vadd.f32 %v408, %v398
    %v433 = vxor.u32 %v417, 2147483648
    %v434 = vxor.u32 %v418, 2147483648
    %v435 = vxor.u32 %v419, 2147483648
    %v436 = vxor.u32 %v420, 2147483648
    %v437 = vxor.u32 %v421, 2147483648
    %v438 = vxor.u32 %v422, 2147483648
    %v439 = vxor.u32 %v423, 2147483648
    %v440 = vxor.u32 %v424, 2147483648
    %v441 = vxor.u32 %v425, 2147483648
    %v442 = vxor.u32 %v426, 2147483648
    %v443 = vxor.u32 %v427, 2147483648
    %v444 = vxor.u32 %v428, 2147483648
    %v445 = vxor.u32 %v429, 2147483648
    %v446 = vxor.u32 %v430, 2147483648
    %v447 = vxor.u32 %v431, 2147483648
    %v448 = vxor.u32 %v432, 2147483648
    %v449 = vmul.f32 %v433, 1.442695
    %v450 = vpow.pop %v449
    %v451 = vmul.f32 %v434, 1.442695
    %v452 = vpow.pop %v451
    %v453 = vmul.f32 %v435, 1.442695
    %v454 = vpow.pop %v453
    %v455 = vmul.f32 %v436, 1.442695
    %v456 = vpow.pop %v455
    %v457 = vmul.f32 %v437, 1.442695
    %v458 = vpow.pop %v457
    %v459 = vmul.f32 %v438, 1.442695
    %v460 = vpow.pop %v459
    %v461 = vmul.f32 %v439, 1.442695
    %v462 = vpow.pop %v461
    %v463 = vmul.f32 %v440, 1.442695
    %v464 = vpow.pop %v463
    %v465 = vmul.f32 %v441, 1.442695
    %v466 = vpow.pop %v465
    %v467 = vmul.f32 %v442, 1.442695
    %v468 = vpow.pop %v467
    %v469 = vmul.f32 %v443, 1.442695
    %v470 = vpow.pop %v469
    %v471 = vmul.f32 %v444, 1.442695
    %v472 = vpow.pop %v471
    %v473 = vmul.f32 %v445, 1.442695
    %v474 = vpow.pop %v473
    %v475 = vmul.f32 %v446, 1.442695
    %v476 = vpow.pop %v475
    %v477 = vmul.f32 %v447, 1.442695
    %v478 = vpow.pop %v477
    %v479 = vmul.f32 %v448, 1.442695
    %v480 = vpow.pop %v479
    %v481 = vadd.f32 %v450, 1.0
    %v482 = vadd.f32 %v452, 1.0
    %v483 = vadd.f32 %v454, 1.0
    %v484 = vadd.f32 %v456, 1.0
    %v485 = vadd.f32 %v458, 1.0
    %v486 = vadd.f32 %v460, 1.0
    %v487 = vadd.f32 %v462, 1.0
    %v488 = vadd.f32 %v464, 1.0
    %v489 = vadd.f32 %v466, 1.0
    %v490 = vadd.f32 %v468, 1.0
    %v491 = vadd.f32 %v470, 1.0
    %v492 = vadd.f32 %v472, 1.0
    %v493 = vadd.f32 %v474, 1.0
    %v494 = vadd.f32 %v476, 1.0
    %v495 = vadd.f32 %v478, 1.0
    %v496 = vadd.f32 %v480, 1.0
    %v497 = vrcp.pop %v481
    %v498 = vmul.f32 1.0, %v497
    %v499 = vrcp.pop %v482
    %v500 = vmul.f32 1.0, %v499
    %v501 = vrcp.pop %v483
    %v502 = vmul.f32 1.0, %v501
    %v503 = vrcp.pop %v484
    %v504 = vmul.f32 1.0, %v503
    %v505 = vrcp.pop %v485
    %v506 = vmul.f32 1.0, %v505
    %v507 = vrcp.pop %v486
    %v508 = vmul.f32 1.0, %v507
    %v509 = vrcp.pop %v487
    %v510 = vmul.f32 1.0, %v509
    %v511 = vrcp.pop %v488
    %v512 = vmul.f32 1.0, %v511
    %v513 = vrcp.pop %v489
    %v514 = vmul.f32 1.0, %v513
    %v515 = vrcp.pop %v490
    %v516 = vmul.f32 1.0, %v515
    %v517 = vrcp.pop %v491
    %v518 = vmul.f32 1.0, %v517
    %v519 = vrcp.pop %v492
    %v520 = vmul.f32 1.0, %v519
    %v521 = vrcp.pop %v493
    %v522 = vmul.f32 1.0, %v521
    %v523 = vrcp.pop %v494
    %v524 = vmul.f32 1.0, %v523
    %v525 = vrcp.pop %v495
    %v526 = vmul.f32 1.0, %v525
    %v527 = vrcp.pop %v496
    %v528 = vmul.f32 1.0, %v527
    %v529 = vrot.slane %v279, 4
    %v530 = vrot.slane %v280, 4
    %v533 = vrot.slane %v231, 4
    %v534 = vrot.slane %v232, 4
    %v535 = vrot.slane %v233, 4
    %v536 = vrot.slane %v234, 4
    %v537 = vrot.slane %v267, 4
    %v538 = vrot.slane %v268, 4
    %v539 = vrot.slane %v269, 4
    %v540 = vrot.slane %v270, 4
    %v549 = vadd.f32 %v533, %v529
    %v550 = vadd.f32 %v534, %v529
    %v551 = vadd.f32 %v535, %v529
    %v552 = vadd.f32 %v536, %v529
    %v553 = vadd.f32 %v537, %v529
    %v554 = vadd.f32 %v538, %v529
    %v555 = vadd.f32 %v539, %v529
    %v556 = vadd.f32 %v540, %v529
    %v557 = vadd.f32 %v533, %v530
    %v558 = vadd.f32 %v534, %v530
    %v559 = vadd.f32 %v535, %v530
    %v560 = vadd.f32 %v536, %v530
    %v561 = vadd.f32 %v537, %v530
    %v562 = vadd.f32 %v538, %v530
    %v563 = vadd.f32 %v539, %v530
    %v564 = vadd.f32 %v540, %v530
    %v565 = vtanh.pop %v549
    %v566 = vtanh.pop %v550
    %v567 = vtanh.pop %v551
    %v568 = vtanh.pop %v552
    %v569 = vtanh.pop %v553
    %v570 = vtanh.pop %v554
    %v571 = vtanh.pop %v555
    %v572 = vtanh.pop %v556
    %v573 = vtanh.pop %v557
    %v574 = vtanh.pop %v558
    %v575 = vtanh.pop %v559
    %v576 = vtanh.pop %v560
    %v577 = vtanh.pop %v561
    %v578 = vtanh.pop %v562
    %v579 = vtanh.pop %v563
    %v580 = vtanh.pop %v564
    %v581 = vrot.slane %v279, 6
    %v582 = vrot.slane %v280, 6
    %v585 = vrot.slane %v231, 6
    %v586 = vrot.slane %v232, 6
    %v587 = vrot.slane %v233, 6
    %v588 = vrot.slane %v234, 6
    %v589 = vrot.slane %v267, 6
    %v590 = vrot.slane %v268, 6
    %v591 = vrot.slane %v269, 6
    %v592 = vrot.slane %v270, 6
    %v601 = vadd.f32 %v585, %v581
    %v602 = vadd.f32 %v586, %v581
    %v603 = vadd.f32 %v587, %v581
    %v604 = vadd.f32 %v588, %v581
    %v605 = vadd.f32 %v589, %v581
    %v606 = vadd.f32 %v590, %v581
    %v607 = vadd.f32 %v591, %v581
    %v608 = vadd.f32 %v592, %v581
    %v609 = vadd.f32 %v585, %v582
    %v610 = vadd.f32 %v586, %v582
    %v611 = vadd.f32 %v587, %v582
    %v612 = vadd.f32 %v588, %v582
    %v613 = vadd.f32 %v589, %v582
    %v614 = vadd.f32 %v590, %v582
    %v615 = vadd.f32 %v591, %v582
    %v616 = vadd.f32 %v592, %v582
    %v617 = vxor.u32 %v601, 2147483648
    %v618 = vxor.u32 %v602, 2147483648
    %v619 = vxor.u32 %v603, 2147483648
    %v620 = vxor.u32 %v604, 2147483648
    %v621 = vxor.u32 %v605, 2147483648
    %v622 = vxor.u32 %v606, 2147483648
    %v623 = vxor.u32 %v607, 2147483648
    %v624 = vxor.u32 %v608, 2147483648
    %v625 = vxor.u32 %v609, 2147483648
    %v626 = vxor.u32 %v610, 2147483648
    %v627 = vxor.u32 %v611, 2147483648
    %v628 = vxor.u32 %v612, 2147483648
    %v629 = vxor.u32 %v613, 2147483648
    %v630 = vxor.u32 %v614, 2147483648
    %v631 = vxor.u32 %v615, 2147483648
    %v632 = vxor.u32 %v616, 2147483648
    %v633 = vmul.f32 %v617, 1.442695
    %v634 = vpow.pop %v633
    %v635 = vmul.f32 %v618, 1.442695
    %v636 = vpow.pop %v635
    %v637 = vmul.f32 %v619, 1.442695
    %v638 = vpow.pop %v637
    %v639 = vmul.f32 %v620, 1.442695
    %v640 = vpow.pop %v639
    %v641 = vmul.f32 %v621, 1.442695
    %v642 = vpow.pop %v641
    %v643 = vmul.f32 %v622, 1.442695
    %v644 = vpow.pop %v643
    %v645 = vmul.f32 %v623, 1.442695
    %v646 = vpow.pop %v645
    %v647 = vmul.f32 %v624, 1.442695
    %v648 = vpow.pop %v647
    %v649 = vmul.f32 %v625, 1.442695
    %v650 = vpow.pop %v649
    %v651 = vmul.f32 %v626, 1.442695
    %v652 = vpow.pop %v651
    %v653 = vmul.f32 %v627, 1.442695
    %v654 = vpow.pop %v653
    %v655 = vmul.f32 %v628, 1.442695
    %v656 = vpow.pop %v655
    %v657 = vmul.f32 %v629, 1.442695
    %v658 = vpow.pop %v657
    %v659 = vmul.f32 %v630, 1.442695
    %v660 = vpow.pop %v659
    %v661 = vmul.f32 %v631, 1.442695
    %v662 = vpow.pop %v661
    %v663 = vmul.f32 %v632, 1.442695
    %v664 = vpow.pop %v663
    %v665 = vadd.f32 %v634, 1.0
    %v666 = vadd.f32 %v636, 1.0
    %v667 = vadd.f32 %v638, 1.0
    %v668 = vadd.f32 %v640, 1.0
    %v669 = vadd.f32 %v642, 1.0
    %v670 = vadd.f32 %v644, 1.0
    %v671 = vadd.f32 %v646, 1.0
    %v672 = vadd.f32 %v648, 1.0
    %v673 = vadd.f32 %v650, 1.0
    %v674 = vadd.f32 %v652, 1.0
    %v675 = vadd.f32 %v654, 1.0
    %v676 = vadd.f32 %v656, 1.0
    %v677 = vadd.f32 %v658, 1.0
    %v678 = vadd.f32 %v660, 1.0
    %v679 = vadd.f32 %v662, 1.0
    %v680 = vadd.f32 %v664, 1.0
    %v681 = vrcp.pop %v665
    %v682 = vmul.f32 1.0, %v681
    %v683 = vrcp.pop %v666
    %v684 = vmul.f32 1.0, %v683
    %v685 = vrcp.pop %v667
    %v686 = vmul.f32 1.0, %v685
    %v687 = vrcp.pop %v668
    %v688 = vmul.f32 1.0, %v687
    %v689 = vrcp.pop %v669
    %v690 = vmul.f32 1.0, %v689
    %v691 = vrcp.pop %v670
    %v692 = vmul.f32 1.0, %v691
    %v693 = vrcp.pop %v671
    %v694 = vmul.f32 1.0, %v693
    %v695 = vrcp.pop %v672
    %v696 = vmul.f32 1.0, %v695
    %v697 = vrcp.pop %v673
    %v698 = vmul.f32 1.0, %v697
    %v699 = vrcp.pop %v674
    %v700 = vmul.f32 1.0, %v699
    %v701 = vrcp.pop %v675
    %v702 = vmul.f32 1.0, %v701
    %v703 = vrcp.pop %v676
    %v704 = vmul.f32 1.0, %v703
    %v705 = vrcp.pop %v677
    %v706 = vmul.f32 1.0, %v705
    %v707 = vrcp.pop %v678
    %v708 = vmul.f32 1.0, %v707
    %v709 = vrcp.pop %v679
    %v710 = vmul.f32 1.0, %v709
    %v711 = vrcp.pop %v680
    %v712 = vmul.f32 1.0, %v711
    %v713 = vmul.f32 %v498, %v281
    %v714 = vmul.f32 %v500, %v281
    %v715 = vmul.f32 %v502, %v281
    %v716 = vmul.f32 %v504, %v281
    %v717 = vmul.f32 %v506, %v281
    %v718 = vmul.f32 %v508, %v281
    %v719 = vmul.f32 %v510, %v281
    %v720 = vmul.f32 %v512, %v281
    %v721 = vmul.f32 %v514, %v282
    %v722 = vmul.f32 %v516, %v282
    %v723 = vmul.f32 %v518, %v282
    %v724 = vmul.f32 %v520, %v282
    %v725 = vmul.f32 %v522, %v282
    %v726 = vmul.f32 %v524, %v282
    %v727 = vmul.f32 %v526, %v282
    %v728 = vmul.f32 %v528, %v282
    %v729 = vmul.f32 %v364, %v565
    %v730 = vmul.f32 %v366, %v566
    %v731 = vmul.f32 %v368, %v567
    %v732 = vmul.f32 %v370, %v568
    %v733 = vmul.f32 %v372, %v569
    %v734 = vmul.f32 %v374, %v570
    %v735 = vmul.f32 %v376, %v571
    %v736 = vmul.f32 %v378, %v572
    %v737 = vmul.f32 %v380, %v573
    %v738 = vmul.f32 %v382, %v574
    %v739 = vmul.f32 %v384, %v575
    %v740 = vmul.f32 %v386, %v576
    %v741 = vmul.f32 %v388, %v577
    %v742 = vmul.f32 %v390, %v578
    %v743 = vmul.f32 %v392, %v579
    %v744 = vmul.f32 %v394, %v580
    %v745 = vadd.f32 %v713, %v729
    %v746 = vadd.f32 %v714, %v730
    %v747 = vadd.f32 %v715, %v731
    %v748 = vadd.f32 %v716, %v732
    %v749 = vadd.f32 %v717, %v733
    %v750 = vadd.f32 %v718, %v734
    %v751 = vadd.f32 %v719, %v735
    %v752 = vadd.f32 %v720, %v736
    %v753 = vadd.f32 %v721, %v737
    %v754 = vadd.f32 %v722, %v738
    %v755 = vadd.f32 %v723, %v739
    %v756 = vadd.f32 %v724, %v740
    %v757 = vadd.f32 %v725, %v741
    %v758 = vadd.f32 %v726, %v742
    %v759 = vadd.f32 %v727, %v743
    %v760 = vadd.f32 %v728, %v744
    %v761 = vtanh.pop %v745
    %v762 = vtanh.pop %v746
    %v763 = vtanh.pop %v747
    %v764 = vtanh.pop %v748
    %v765 = vtanh.pop %v749
    %v766 = vtanh.pop %v750
    %v767 = vtanh.pop %v751
    %v768 = vtanh.pop %v752
    %v769 = vtanh.pop %v753
    %v770 = vtanh.pop %v754
    %v771 = vtanh.pop %v755
    %v772 = vtanh.pop %v756
    %v773 = vtanh.pop %v757
    %v774 = vtanh.pop %v758
    %v775 = vtanh.pop %v759
    %v776 = vtanh.pop %v760
    %v777 = vmul.f32 %v682, %v761
    %v778 = vmul.f32 %v684, %v762
    %v779 = vmul.f32 %v686, %v763
    %v780 = vmul.f32 %v688, %v764
    %v781 = vmul.f32 %v690, %v765
    %v782 = vmul.f32 %v692, %v766
    %v783 = vmul.f32 %v694, %v767
    %v784 = vmul.f32 %v696, %v768
    %v785 = vmul.f32 %v698, %v769
    %v786 = vmul.f32 %v700, %v770
    %v787 = vmul.f32 %v702, %v771
    %v788 = vmul.f32 %v704, %v772
    %v789 = vmul.f32 %v706, %v773
    %v790 = vmul.f32 %v708, %v774
    %v791 = vmul.f32 %v710, %v775
    %v792 = vmul.f32 %v712, %v776
    %793 = vst [vmem:[%s4] sm:$0x3] %v777
    %794 = vst [vmem:[%s4 + $0x2] sm:$0x3] %v778
    %795 = vst [vmem:[%s4 + $0x4] sm:$0x3] %v779
    %796 = vst [vmem:[%s4 + $0x6] sm:$0x3] %v780
    %797 = vst [vmem:[%s4 + $0x8] sm:$0x3] %v781
    %798 = vst [vmem:[%s4 + $0xa] sm:$0x3] %v782
    %799 = vst [vmem:[%s4 + $0xc] sm:$0x3] %v783
    %800 = vst [vmem:[%s4 + $0xe] sm:$0x3] %v784
    %801 = vst [vmem:[%s4 + $0x10] sm:$0x3] %v785
    %802 = vst [vmem:[%s4 + $0x12] sm:$0x3] %v786
    %803 = vst [vmem:[%s4 + $0x14] sm:$0x3] %v787
    %804 = vst [vmem:[%s4 + $0x16] sm:$0x3] %v788
    %805 = vst [vmem:[%s4 + $0x18] sm:$0x3] %v789
    %806 = vst [vmem:[%s4 + $0x1a] sm:$0x3] %v790
    %807 = vst [vmem:[%s4 + $0x1c] sm:$0x3] %v791
    %808 = vst [vmem:[%s4 + $0x1e] sm:$0x3] %v792
    %809 = vst [vmem:[#allocation2] sm:$0x3] %v752
    %810 = vst [vmem:[#allocation2 + $0x2] sm:$0x3] %v760
    // Predicated region
    $region18: #{_lambda_.1} parent=1 // pred_check
      _
    $region19: #{_lambda_.1} parent=1 // pred_check_branch
      %812 = sbr.rel (0) target = $region21
    $region20: #{_lambda_.1} parent=1 // pred_region
      _
    $region21: #{_lambda_.1} parent=1 // pred_fallthru
      _
    // Predicated region
    $region22: #{_lambda_.1} parent=1 // pred_check
      _
    $region23: #{_lambda_.1} parent=1 // pred_check_branch
      %814 = sbr.rel (0) target = $region25
    $region24: #{_lambda_.1} parent=1 // pred_region
      %s816 = ssub.s32 64, 64
      %817 = vsyncadd [#allocation3], %s816
      %s818 = sshll.u32 [#allocation2], 4
      %s819 = int_to_ptr.vmem [resolvable:$true] %s818
      %824 = dma.vmem_to_hbm [thread:$0]  %s819, 64, %s5, [#allocation3], 32, 32, 2
    $region25: #{_lambda_.1} parent=1 // pred_fallthru
      _
    // Predicated region
    $region26: #{_lambda_.1} parent=1 // pred_check
      _
    $region27: #{_lambda_.1} parent=1 // pred_check_branch
      %826 = sbr.rel (0) target = $region29
    $region28: #{_lambda_.1} parent=1 // pred_region
      _
    $region29: #{_lambda_.1} parent=1 // pred_fallthru
      _
    // Predicated region
    $region30: #{_lambda_.1} parent=1 // pred_check
      _
    $region31: #{_lambda_.1} parent=1 // pred_check_branch
      %828 = sbr.rel (0) target = $region33
    $region32: #{_lambda_.1} parent=1 // pred_region
      %829 = dma.done [#allocation3], 64
    $region33: #{_lambda_.1} parent=1 // pred_fallthru
      _
    %830 = vsyncpa [#allocation3], 1

// kernel: _lambda_.1
$region0: #{_lambda_.1}
  #allocation0 [shape = 'u32[]', space=smem, size = 0x4, offset = 0x4, fixed_abs, tag = 'smem constant byte address 0x4 - core index']
  #allocation1 [shape = 'u32[144,128]{1,0:T(1,128)}', space=vmem, size = 0x12000, scoped, tag = 'internal scratch']
  %s0 = inlined_call_operand.vmem [shape: f32[16,16], index: 0, kind: input, shape index: {}]
  %s1 = inlined_call_operand.vmem [shape: f32[2,2,128], index: 1, kind: input, shape index: {}]
  %s2 = inlined_call_operand.vmem [shape: f32[2,2,512], index: 2, kind: input, shape index: {}]
  %s3 = inlined_call_operand.vmem [shape: f32[16,512], index: 3, kind: input, shape index: {}]
  %s4 = inlined_call_operand.vmem [shape: f32[2,8,2,128], index: 4, kind: output, shape index: {0}]
  %s5 = inlined_call_operand.hbm [shape: f32[1,2,2,128], index: 5, kind: output, shape index: {1}]
  %6 = xla_tuple %s4, %s5
  %s7 = sld [smem:[#allocation0]]
  $region34: #{_lambda_.1} parent=0
    _
  %s9 = ssub.s32 1, %s7
  %s10 = scalar_select 0, %s9, %s7
  $region1: #{_lambda_.1} parent=0
    #allocation2 [shape = 'u8[2048]{0}', space=vmem, size = 0x800, scoped, tag = 'output window, operand 1, single buffered']
    #allocation3 [shape = 's32[1]{0}', space=sflag, size = 0x4, scoped, tag = 'scoped memory for _lambda_.1']
    %11 = vsyncpa [#allocation3], 0
    // Predicated region
    $region2: #{_lambda_.1} parent=1 // pred_check
      _
    $region3: #{_lambda_.1} parent=1 // pred_check_branch
      %13 = sbr.rel (0) target = $region5
    $region4: #{_lambda_.1} parent=1 // pred_region
      _
    $region5: #{_lambda_.1} parent=1 // pred_fallthru
      _
    // Predicated region
    $region6: #{_lambda_.1} parent=1 // pred_check
      _
    $region7: #{_lambda_.1} parent=1 // pred_check_branch
      %15 = sbr.rel (0) target = $region9
    $region8: #{_lambda_.1} parent=1 // pred_region
      _
    $region9: #{_lambda_.1} parent=1 // pred_fallthru
      _
    // Predicated region
    $region10: #{_lambda_.1} parent=1 // pred_check
      _
    $region11: #{_lambda_.1} parent=1 // pred_check_branch
      %17 = sbr.rel (0) target = $region13
    $region12: #{_lambda_.1} parent=1 // pred_region
      _
    $region13: #{_lambda_.1} parent=1 // pred_fallthru
      _
    // Predicated region
    $region14: #{_lambda_.1} parent=1 // pred_check
      _
    $region15: #{_lambda_.1} parent=1 // pred_check_branch
      %19 = sbr.rel (0) target = $region17
    $region16: #{_lambda_.1} parent=1 // pred_region
      _
    $region17: #{_lambda_.1} parent=1 // pred_fallthru
      _
    %v20 = vld [vmem:[%s0] sm:$0xff]
    %v21 = vld [vmem:[%s0 + $0x8] sm:$0xff]
    %v22 = vld [vmem:[%s3] sm:$0xff]
    %v23 = vld [vmem:[%s3 + $0x8] sm:$0xff]
    %v24 = vld [vmem:[%s3 + $0x10] sm:$0xff]
    %v25 = vld [vmem:[%s3 + $0x18] sm:$0xff]
    %v26 = vld [vmem:[%s3 + $0x20] sm:$0xff]
    %v27 = vld [vmem:[%s3 + $0x28] sm:$0xff]
    %v28 = vld [vmem:[%s3 + $0x30] sm:$0xff]
    %v29 = vld [vmem:[%s3 + $0x38] sm:$0xff]
    %vm30 = vcmask 130048
    %v32 = vsel %vm30, %v20, 0
    %v35 = vsel %vm30, %v21, 0
    %37 = vmatprep.subr.mxu0 0.0
    %38 = vmatpush1.msra.mxu0 0.0
    %39 = vmatprep.subr.mxu0 0.0
    %40 = vmatpush1.msra.mxu0 0.0
    %41 = vmatprep.subr.mxu0 0.0
    %42 = vmatpush1.msra.mxu0 0.0
    %43 = vmatprep.subr.mxu0 0.0
    %44 = vmatpush1.msra.mxu0 0.0
    %45 = vmatprep.subr.mxu0 0.0
    %46 = vmatpush1.msra.mxu0 0.0
    %47 = vmatprep.subr.mxu0 0.0
    %48 = vmatpush1.msra.mxu0 0.0
    %49 = vmatprep.subr.mxu0 0.0
    %50 = vmatpush1.msra.mxu0 0.0
    %51 = vmatprep.subr.mxu0 0.0
    %52 = vmatpush1.msra.mxu0 0.0
    %53 = vmatprep.subr.mxu0 0.0
    %54 = vmatpush1.msra.mxu0 0.0
    %55 = vmatprep.subr.mxu0 0.0
    %56 = vmatpush1.msra.mxu0 0.0
    %57 = vmatprep.subr.mxu0 0.0
    %58 = vmatpush1.msra.mxu0 0.0
    %59 = vmatprep.subr.mxu0 0.0
    %60 = vmatpush1.msra.mxu0 0.0
    %61 = vmatprep.subr.mxu0 0.0
    %62 = vmatpush1.msra.mxu0 0.0
    %63 = vmatprep.subr.mxu0 0.0
    %64 = vmatpush1.msra.mxu0 0.0
    %65 = vmatprep.subr.mxu0 %v27
    %66 = vmatpush1.msra.mxu0 %v26
    %67 = vmatprep.subr.mxu0 %v23
    %68 = vmatpush1.msra.mxu0 %v22
    %69 = vmatprep.subr.mxu0 0.0
    %70 = vmatpush2.msra.mxu0 0.0
    %71 = vmatprep.subr.mxu0 0.0
    %72 = vmatpush2.msra.mxu0 0.0
    %73 = vmatprep.subr.mxu0 0.0
    %74 = vmatpush2.msra.mxu0 0.0
    %75 = vmatprep.subr.mxu0 0.0
    %76 = vmatpush2.msra.mxu0 0.0
    %77 = vmatprep.subr.mxu0 0.0
    %78 = vmatpush2.msra.mxu0 0.0
    %79 = vmatprep.subr.mxu0 0.0
    %80 = vmatpush2.msra.mxu0 0.0
    %81 = vmatprep.subr.mxu0 0.0
    %82 = vmatpush2.msra.mxu0 0.0
    %83 = vmatprep.subr.mxu0 0.0
    %84 = vmatpush2.msra.mxu0 0.0
    %85 = vmatprep.subr.mxu0 0.0
    %86 = vmatpush2.msra.mxu0 0.0
    %87 = vmatprep.subr.mxu0 0.0
    %88 = vmatpush2.msra.mxu0 0.0
    %89 = vmatprep.subr.mxu0 0.0
    %90 = vmatpush2.msra.mxu0 0.0
    %91 = vmatprep.subr.mxu0 0.0
    %92 = vmatpush2.msra.mxu0 0.0
    %93 = vmatprep.subr.mxu0 0.0
    %94 = vmatpush2.msra.mxu0 0.0
    %95 = vmatprep.subr.mxu0 0.0
    %96 = vmatpush2.msra.mxu0 0.0
    %97 = vmatprep.subr.mxu0 0.0
    %98 = vmatpush2.msra.mxu0 0.0
    %99 = vmatprep.subr.mxu0 0.0
    %100 = vmatpush2.msra.mxu0 0.0
    %101 = vmatprep.mubr.f32.mxu0 0.0
    %102 = vmatmul.mubr.f32.gmra.mxu0 %v32
    %v103 = vpop.f32.mrf.mxu0
    %v104 = vadd.f32 0.0, %v103
    %v105 = vpop.f32.mrf.mxu0
    %v106 = vadd.f32 0.0, %v105
    %107 = vmatprep.mubr.f32.mxu0 0.0
    %108 = vmatmul.mubr.f32.gmra.mxu0 %v35
    %v109 = vpop.f32.mrf.mxu0
    %v110 = vadd.f32 0.0, %v109
    %v111 = vpop.f32.mrf.mxu0
    %v112 = vadd.f32 0.0, %v111
    %113 = vdwg.mxu0
    %114 = vmatprep.subr.mxu0 0.0
    %115 = vmatpush1.msra.mxu0 0.0
    %116 = vmatprep.subr.mxu0 0.0
    %117 = vmatpush1.msra.mxu0 0.0
    %118 = vmatprep.subr.mxu0 0.0
    %119 = vmatpush1.msra.mxu0 0.0
    %120 = vmatprep.subr.mxu0 0.0
    %121 = vmatpush1.msra.mxu0 0.0
    %122 = vmatprep.subr.mxu0 0.0
    %123 = vmatpush1.msra.mxu0 0.0
    %124 = vmatprep.subr.mxu0 0.0
    %125 = vmatpush1.msra.mxu0 0.0
    %126 = vmatprep.subr.mxu0 0.0
    %127 = vmatpush1.msra.mxu0 0.0
    %128 = vmatprep.subr.mxu0 0.0
    %129 = vmatpush1.msra.mxu0 0.0
    %130 = vmatprep.subr.mxu0 0.0
    %131 = vmatpush1.msra.mxu0 0.0
    %132 = vmatprep.subr.mxu0 0.0
    %133 = vmatpush1.msra.mxu0 0.0
    %134 = vmatprep.subr.mxu0 0.0
    %135 = vmatpush1.msra.mxu0 0.0
    %136 = vmatprep.subr.mxu0 0.0
    %137 = vmatpush1.msra.mxu0 0.0
    %138 = vmatprep.subr.mxu0 0.0
    %139 = vmatpush1.msra.mxu0 0.0
    %140 = vmatprep.subr.mxu0 0.0
    %141 = vmatpush1.msra.mxu0 0.0
    %142 = vmatprep.subr.mxu0 %v29
    %143 = vmatpush1.msra.mxu0 %v28
    %144 = vmatprep.subr.mxu0 %v25
    %145 = vmatpush1.msra.mxu0 %v24
    %146 = vmatprep.subr.mxu0 0.0
    %147 = vmatpush2.msra.mxu0 0.0
    %148 = vmatprep.subr.mxu0 0.0
    %149 = vmatpush2.msra.mxu0 0.0
    %150 = vmatprep.subr.mxu0 0.0
    %151 = vmatpush2.msra.mxu0 0.0
    %152 = vmatprep.subr.mxu0 0.0
    %153 = vmatpush2.msra.mxu0 0.0
    %154 = vmatprep.subr.mxu0 0.0
    %155 = vmatpush2.msra.mxu0 0.0
    %156 = vmatprep.subr.mxu0 0.0
    %157 = vmatpush2.msra.mxu0 0.0
    %158 = vmatprep.subr.mxu0 0.0
    %159 = vmatpush2.msra.mxu0 0.0
    %160 = vmatprep.subr.mxu0 0.0
    %161 = vmatpush2.msra.mxu0 0.0
    %162 = vmatprep.subr.mxu0 0.0
    %163 = vmatpush2.msra.mxu0 0.0
    %164 = vmatprep.subr.mxu0 0.0
    %165 = vmatpush2.msra.mxu0 0.0
    %166 = vmatprep.subr.mxu0 0.0
    %167 = vmatpush2.msra.mxu0 0.0
    %168 = vmatprep.subr.mxu0 0.0
    %169 = vmatpush2.msra.mxu0 0.0
    %170 = vmatprep.subr.mxu0 0.0
    %171 = vmatpush2.msra.mxu0 0.0
    %172 = vmatprep.subr.mxu0 0.0
    %173 = vmatpush2.msra.mxu0 0.0
    %174 = vmatprep.subr.mxu0 0.0
    %175 = vmatpush2.msra.mxu0 0.0
    %176 = vmatprep.subr.mxu0 0.0
    %177 = vmatpush2.msra.mxu0 0.0
    %178 = vmatprep.mubr.f32.mxu0 0.0
    %179 = vmatmul.mubr.f32.gmra.mxu0 %v32
    %v180 = vpop.f32.mrf.mxu0
    %v181 = vadd.f32 0.0, %v180
    %v182 = vpop.f32.mrf.mxu0
    %v183 = vadd.f32 0.0, %v182
    %184 = vmatprep.mubr.f32.mxu0 0.0
    %185 = vmatmul.mubr.f32.gmra.mxu0 %v35
    %v186 = vpop.f32.mrf.mxu0
    %v187 = vadd.f32 0.0, %v186
    %v188 = vpop.f32.mrf.mxu0
    %v189 = vadd.f32 0.0, %v188
    %190 = vdwg.mxu0
    %v199 = vcombine.low %v104, %v106
    %v200 = vcombine.high %v104, %v106
    %v201 = vcombine.low %v181, %v183
    %v202 = vcombine.high %v181, %v183
    %v204 = vunpack.c.l.s4 1983009808
    %v205 = vunpack.c.0.s8 %v204
    %v206 = vlaneseq
    %v207 = vshrl.u32 %v206, 7
    %v208 = vsub.s32 %v205, %v207
    %v209 = vrot.slane %v199, %v208
    %v211 = vunpack.c.l.s4 1983009808
    %v212 = vunpack.c.0.s8 %v211
    %v213 = vlaneseq
    %v214 = vshrl.u32 %v213, 7
    %v215 = vsub.s32 %v212, %v214
    %v216 = vrot.slane %v200, %v215
    %v218 = vunpack.c.l.s4 1983009808
    %v219 = vunpack.c.0.s8 %v218
    %v220 = vlaneseq
    %v221 = vshrl.u32 %v220, 7
    %v222 = vsub.s32 %v219, %v221
    %v223 = vrot.slane %v201, %v222
    %v225 = vunpack.c.l.s4 1983009808
    %v226 = vunpack.c.0.s8 %v225
    %v227 = vlaneseq
    %v228 = vshrl.u32 %v227, 7
    %v229 = vsub.s32 %v226, %v228
    %v230 = vrot.slane %v202, %v229
    %v231 = vcombine.low %v209, %v223
    %v232 = vcombine.high %v209, %v223
    %v233 = vcombine.low %v216, %v230
    %v234 = vcombine.high %v216, %v230
    %v235 = vcombine.low %v110, %v112
    %v236 = vcombine.high %v110, %v112
    %v237 = vcombine.low %v187, %v189
    %v238 = vcombine.high %v187, %v189
    %v240 = vunpack.c.l.s4 1983009808
    %v241 = vunpack.c.0.s8 %v240
    %v242 = vlaneseq
    %v243 = vshrl.u32 %v242, 7
    %v244 = vsub.s32 %v241, %v243
    %v245 = vrot.slane %v235, %v244
    %v247 = vunpack.c.l.s4 1983009808
    %v248 = vunpack.c.0.s8 %v247
    %v249 = vlaneseq
    %v250 = vshrl.u32 %v249, 7
    %v251 = vsub.s32 %v248, %v250
    %v252 = vrot.slane %v236, %v251
    %v254 = vunpack.c.l.s4 1983009808
    %v255 = vunpack.c.0.s8 %v254
    %v256 = vlaneseq
    %v257 = vshrl.u32 %v256, 7
    %v258 = vsub.s32 %v255, %v257
    %v259 = vrot.slane %v237, %v258
    %v261 = vunpack.c.l.s4 1983009808
    %v262 = vunpack.c.0.s8 %v261
    %v263 = vlaneseq
    %v264 = vshrl.u32 %v263, 7
    %v265 = vsub.s32 %v262, %v264
    %v266 = vrot.slane %v238, %v265
    %v267 = vcombine.low %v245, %v259
    %v268 = vcombine.high %v245, %v259
    %v269 = vcombine.low %v252, %v266
    %v270 = vcombine.high %v252, %v266
    %v279 = vld [vmem:[%s2] sm:$0xff]
    %v280 = vld [vmem:[%s2 + $0x8] sm:$0xff]
    %v281 = vld [vmem:[%s1] sm:$0x3]
    %v282 = vld [vmem:[%s1 + $0x2] sm:$0x3]
    %v283 = vadd.f32 %v231, %v279
    %v284 = vadd.f32 %v232, %v279
    %v285 = vadd.f32 %v233, %v279
    %v286 = vadd.f32 %v234, %v279
    %v287 = vadd.f32 %v267, %v279
    %v288 = vadd.f32 %v268, %v279
    %v289 = vadd.f32 %v269, %v279
    %v290 = vadd.f32 %v270, %v279
    %v291 = vadd.f32 %v231, %v280
    %v292 = vadd.f32 %v232, %v280
    %v293 = vadd.f32 %v233, %v280
    %v294 = vadd.f32 %v234, %v280
    %v295 = vadd.f32 %v267, %v280
    %v296 = vadd.f32 %v268, %v280
    %v297 = vadd.f32 %v269, %v280
    %v298 = vadd.f32 %v270, %v280
    %v299 = vxor.u32 %v283, 2147483648
    %v300 = vxor.u32 %v284, 2147483648
    %v301 = vxor.u32 %v285, 2147483648
    %v302 = vxor.u32 %v286, 2147483648
    %v303 = vxor.u32 %v287, 2147483648
    %v304 = vxor.u32 %v288, 2147483648
    %v305 = vxor.u32 %v289, 2147483648
    %v306 = vxor.u32 %v290, 2147483648
    %v307 = vxor.u32 %v291, 2147483648
    %v308 = vxor.u32 %v292, 2147483648
    %v309 = vxor.u32 %v293, 2147483648
    %v310 = vxor.u32 %v294, 2147483648
    %v311 = vxor.u32 %v295, 2147483648
    %v312 = vxor.u32 %v296, 2147483648
    %v313 = vxor.u32 %v297, 2147483648
    %v314 = vxor.u32 %v298, 2147483648
    %v315 = vmul.f32 %v299, 1.442695
    %v316 = vpow.pop %v315
    %v317 = vmul.f32 %v300, 1.442695
    %v318 = vpow.pop %v317
    %v319 = vmul.f32 %v301, 1.442695
    %v320 = vpow.pop %v319
    %v321 = vmul.f32 %v302, 1.442695
    %v322 = vpow.pop %v321
    %v323 = vmul.f32 %v303, 1.442695
    %v324 = vpow.pop %v323
    %v325 = vmul.f32 %v304, 1.442695
    %v326 = vpow.pop %v325
    %v327 = vmul.f32 %v305, 1.442695
    %v328 = vpow.pop %v327
    %v329 = vmul.f32 %v306, 1.442695
    %v330 = vpow.pop %v329
    %v331 = vmul.f32 %v307, 1.442695
    %v332 = vpow.pop %v331
    %v333 = vmul.f32 %v308, 1.442695
    %v334 = vpow.pop %v333
    %v335 = vmul.f32 %v309, 1.442695
    %v336 = vpow.pop %v335
    %v337 = vmul.f32 %v310, 1.442695
    %v338 = vpow.pop %v337
    %v339 = vmul.f32 %v311, 1.442695
    %v340 = vpow.pop %v339
    %v341 = vmul.f32 %v312, 1.442695
    %v342 = vpow.pop %v341
    %v343 = vmul.f32 %v313, 1.442695
    %v344 = vpow.pop %v343
    %v345 = vmul.f32 %v314, 1.442695
    %v346 = vpow.pop %v345
    %v347 = vadd.f32 %v316, 1.0
    %v348 = vadd.f32 %v318, 1.0
    %v349 = vadd.f32 %v320, 1.0
    %v350 = vadd.f32 %v322, 1.0
    %v351 = vadd.f32 %v324, 1.0
    %v352 = vadd.f32 %v326, 1.0
    %v353 = vadd.f32 %v328, 1.0
    %v354 = vadd.f32 %v330, 1.0
    %v355 = vadd.f32 %v332, 1.0
    %v356 = vadd.f32 %v334, 1.0
    %v357 = vadd.f32 %v336, 1.0
    %v358 = vadd.f32 %v338, 1.0
    %v359 = vadd.f32 %v340, 1.0
    %v360 = vadd.f32 %v342, 1.0
    %v361 = vadd.f32 %v344, 1.0
    %v362 = vadd.f32 %v346, 1.0
    %v363 = vrcp.pop %v347
    %v364 = vmul.f32 1.0, %v363
    %v365 = vrcp.pop %v348
    %v366 = vmul.f32 1.0, %v365
    %v367 = vrcp.pop %v349
    %v368 = vmul.f32 1.0, %v367
    %v369 = vrcp.pop %v350
    %v370 = vmul.f32 1.0, %v369
    %v371 = vrcp.pop %v351
    %v372 = vmul.f32 1.0, %v371
    %v373 = vrcp.pop %v352
    %v374 = vmul.f32 1.0, %v373
    %v375 = vrcp.pop %v353
    %v376 = vmul.f32 1.0, %v375
    %v377 = vrcp.pop %v354
    %v378 = vmul.f32 1.0, %v377
    %v379 = vrcp.pop %v355
    %v380 = vmul.f32 1.0, %v379
    %v381 = vrcp.pop %v356
    %v382 = vmul.f32 1.0, %v381
    %v383 = vrcp.pop %v357
    %v384 = vmul.f32 1.0, %v383
    %v385 = vrcp.pop %v358
    %v386 = vmul.f32 1.0, %v385
    %v387 = vrcp.pop %v359
    %v388 = vmul.f32 1.0, %v387
    %v389 = vrcp.pop %v360
    %v390 = vmul.f32 1.0, %v389
    %v391 = vrcp.pop %v361
    %v392 = vmul.f32 1.0, %v391
    %v393 = vrcp.pop %v362
    %v394 = vmul.f32 1.0, %v393
    %v397 = vrot.slane %v279, 2
    %v398 = vrot.slane %v280, 2
    %v401 = vrot.slane %v231, 2
    %v402 = vrot.slane %v232, 2
    %v403 = vrot.slane %v233, 2
    %v404 = vrot.slane %v234, 2
    %v405 = vrot.slane %v267, 2
    %v406 = vrot.slane %v268, 2
    %v407 = vrot.slane %v269, 2
    %v408 = vrot.slane %v270, 2
    %v417 = vadd.f32 %v401, %v397
    %v418 = vadd.f32 %v402, %v397
    %v419 = vadd.f32 %v403, %v397
    %v420 = vadd.f32 %v404, %v397
    %v421 = vadd.f32 %v405, %v397
    %v422 = vadd.f32 %v406, %v397
    %v423 = vadd.f32 %v407, %v397
    %v424 = vadd.f32 %v408, %v397
    %v425 = vadd.f32 %v401, %v398
    %v426 = vadd.f32 %v402, %v398
    %v427 = vadd.f32 %v403, %v398
    %v428 = vadd.f32 %v404, %v398
    %v429 = vadd.f32 %v405, %v398
    %v430 = vadd.f32 %v406, %v398
    %v431 = vadd.f32 %v407, %v398
    %v432 = vadd.f32 %v408, %v398
    %v433 = vxor.u32 %v417, 2147483648
    %v434 = vxor.u32 %v418, 2147483648
    %v435 = vxor.u32 %v419, 2147483648
    %v436 = vxor.u32 %v420, 2147483648
    %v437 = vxor.u32 %v421, 2147483648
    %v438 = vxor.u32 %v422, 2147483648
    %v439 = vxor.u32 %v423, 2147483648
    %v440 = vxor.u32 %v424, 2147483648
    %v441 = vxor.u32 %v425, 2147483648
    %v442 = vxor.u32 %v426, 2147483648
    %v443 = vxor.u32 %v427, 2147483648
    %v444 = vxor.u32 %v428, 2147483648
    %v445 = vxor.u32 %v429, 2147483648
    %v446 = vxor.u32 %v430, 2147483648
    %v447 = vxor.u32 %v431, 2147483648
    %v448 = vxor.u32 %v432, 2147483648
    %v449 = vmul.f32 %v433, 1.442695
    %v450 = vpow.pop %v449
    %v451 = vmul.f32 %v434, 1.442695
    %v452 = vpow.pop %v451
    %v453 = vmul.f32 %v435, 1.442695
    %v454 = vpow.pop %v453
    %v455 = vmul.f32 %v436, 1.442695
    %v456 = vpow.pop %v455
    %v457 = vmul.f32 %v437, 1.442695
    %v458 = vpow.pop %v457
    %v459 = vmul.f32 %v438, 1.442695
    %v460 = vpow.pop %v459
    %v461 = vmul.f32 %v439, 1.442695
    %v462 = vpow.pop %v461
    %v463 = vmul.f32 %v440, 1.442695
    %v464 = vpow.pop %v463
    %v465 = vmul.f32 %v441, 1.442695
    %v466 = vpow.pop %v465
    %v467 = vmul.f32 %v442, 1.442695
    %v468 = vpow.pop %v467
    %v469 = vmul.f32 %v443, 1.442695
    %v470 = vpow.pop %v469
    %v471 = vmul.f32 %v444, 1.442695
    %v472 = vpow.pop %v471
    %v473 = vmul.f32 %v445, 1.442695
    %v474 = vpow.pop %v473
    %v475 = vmul.f32 %v446, 1.442695
    %v476 = vpow.pop %v475
    %v477 = vmul.f32 %v447, 1.442695
    %v478 = vpow.pop %v477
    %v479 = vmul.f32 %v448, 1.442695
    %v480 = vpow.pop %v479
    %v481 = vadd.f32 %v450, 1.0
    %v482 = vadd.f32 %v452, 1.0
    %v483 = vadd.f32 %v454, 1.0
    %v484 = vadd.f32 %v456, 1.0
    %v485 = vadd.f32 %v458, 1.0
    %v486 = vadd.f32 %v460, 1.0
    %v487 = vadd.f32 %v462, 1.0
    %v488 = vadd.f32 %v464, 1.0
    %v489 = vadd.f32 %v466, 1.0
    %v490 = vadd.f32 %v468, 1.0
    %v491 = vadd.f32 %v470, 1.0
    %v492 = vadd.f32 %v472, 1.0
    %v493 = vadd.f32 %v474, 1.0
    %v494 = vadd.f32 %v476, 1.0
    %v495 = vadd.f32 %v478, 1.0
    %v496 = vadd.f32 %v480, 1.0
    %v497 = vrcp.pop %v481
    %v498 = vmul.f32 1.0, %v497
    %v499 = vrcp.pop %v482
    %v500 = vmul.f32 1.0, %v499
    %v501 = vrcp.pop %v483
    %v502 = vmul.f32 1.0, %v501
    %v503 = vrcp.pop %v484
    %v504 = vmul.f32 1.0, %v503
    %v505 = vrcp.pop %v485
    %v506 = vmul.f32 1.0, %v505
    %v507 = vrcp.pop %v486
    %v508 = vmul.f32 1.0, %v507
    %v509 = vrcp.pop %v487
    %v510 = vmul.f32 1.0, %v509
    %v511 = vrcp.pop %v488
    %v512 = vmul.f32 1.0, %v511
    %v513 = vrcp.pop %v489
    %v514 = vmul.f32 1.0, %v513
    %v515 = vrcp.pop %v490
    %v516 = vmul.f32 1.0, %v515
    %v517 = vrcp.pop %v491
    %v518 = vmul.f32 1.0, %v517
    %v519 = vrcp.pop %v492
    %v520 = vmul.f32 1.0, %v519
    %v521 = vrcp.pop %v493
    %v522 = vmul.f32 1.0, %v521
    %v523 = vrcp.pop %v494
    %v524 = vmul.f32 1.0, %v523
    %v525 = vrcp.pop %v495
    %v526 = vmul.f32 1.0, %v525
    %v527 = vrcp.pop %v496
    %v528 = vmul.f32 1.0, %v527
    %v529 = vrot.slane %v279, 4
    %v530 = vrot.slane %v280, 4
    %v533 = vrot.slane %v231, 4
    %v534 = vrot.slane %v232, 4
    %v535 = vrot.slane %v233, 4
    %v536 = vrot.slane %v234, 4
    %v537 = vrot.slane %v267, 4
    %v538 = vrot.slane %v268, 4
    %v539 = vrot.slane %v269, 4
    %v540 = vrot.slane %v270, 4
    %v549 = vadd.f32 %v533, %v529
    %v550 = vadd.f32 %v534, %v529
    %v551 = vadd.f32 %v535, %v529
    %v552 = vadd.f32 %v536, %v529
    %v553 = vadd.f32 %v537, %v529
    %v554 = vadd.f32 %v538, %v529
    %v555 = vadd.f32 %v539, %v529
    %v556 = vadd.f32 %v540, %v529
    %v557 = vadd.f32 %v533, %v530
    %v558 = vadd.f32 %v534, %v530
    %v559 = vadd.f32 %v535, %v530
    %v560 = vadd.f32 %v536, %v530
    %v561 = vadd.f32 %v537, %v530
    %v562 = vadd.f32 %v538, %v530
    %v563 = vadd.f32 %v539, %v530
    %v564 = vadd.f32 %v540, %v530
    %v565 = vtanh.pop %v549
    %v566 = vtanh.pop %v550
    %v567 = vtanh.pop %v551
    %v568 = vtanh.pop %v552
    %v569 = vtanh.pop %v553
    %v570 = vtanh.pop %v554
    %v571 = vtanh.pop %v555
    %v572 = vtanh.pop %v556
    %v573 = vtanh.pop %v557
    %v574 = vtanh.pop %v558
    %v575 = vtanh.pop %v559
    %v576 = vtanh.pop %v560
    %v577 = vtanh.pop %v561
    %v578 = vtanh.pop %v562
    %v579 = vtanh.pop %v563
    %v580 = vtanh.pop %v564
    %v581 = vrot.slane %v279, 6
    %v582 = vrot.slane %v280, 6
    %v585 = vrot.slane %v231, 6
    %v586 = vrot.slane %v232, 6
    %v587 = vrot.slane %v233, 6
    %v588 = vrot.slane %v234, 6
    %v589 = vrot.slane %v267, 6
    %v590 = vrot.slane %v268, 6
    %v591 = vrot.slane %v269, 6
    %v592 = vrot.slane %v270, 6
    %v601 = vadd.f32 %v585, %v581
    %v602 = vadd.f32 %v586, %v581
    %v603 = vadd.f32 %v587, %v581
    %v604 = vadd.f32 %v588, %v581
    %v605 = vadd.f32 %v589, %v581
    %v606 = vadd.f32 %v590, %v581
    %v607 = vadd.f32 %v591, %v581
    %v608 = vadd.f32 %v592, %v581
    %v609 = vadd.f32 %v585, %v582
    %v610 = vadd.f32 %v586, %v582
    %v611 = vadd.f32 %v587, %v582
    %v612 = vadd.f32 %v588, %v582
    %v613 = vadd.f32 %v589, %v582
    %v614 = vadd.f32 %v590, %v582
    %v615 = vadd.f32 %v591, %v582
    %v616 = vadd.f32 %v592, %v582
    %v617 = vxor.u32 %v601, 2147483648
    %v618 = vxor.u32 %v602, 2147483648
    %v619 = vxor.u32 %v603, 2147483648
    %v620 = vxor.u32 %v604, 2147483648
    %v621 = vxor.u32 %v605, 2147483648
    %v622 = vxor.u32 %v606, 2147483648
    %v623 = vxor.u32 %v607, 2147483648
    %v624 = vxor.u32 %v608, 2147483648
    %v625 = vxor.u32 %v609, 2147483648
    %v626 = vxor.u32 %v610, 2147483648
    %v627 = vxor.u32 %v611, 2147483648
    %v628 = vxor.u32 %v612, 2147483648
    %v629 = vxor.u32 %v613, 2147483648
    %v630 = vxor.u32 %v614, 2147483648
    %v631 = vxor.u32 %v615, 2147483648
    %v632 = vxor.u32 %v616, 2147483648
    %v633 = vmul.f32 %v617, 1.442695
    %v634 = vpow.pop %v633
    %v635 = vmul.f32 %v618, 1.442695
    %v636 = vpow.pop %v635
    %v637 = vmul.f32 %v619, 1.442695
    %v638 = vpow.pop %v637
    %v639 = vmul.f32 %v620, 1.442695
    %v640 = vpow.pop %v639
    %v641 = vmul.f32 %v621, 1.442695
    %v642 = vpow.pop %v641
    %v643 = vmul.f32 %v622, 1.442695
    %v644 = vpow.pop %v643
    %v645 = vmul.f32 %v623, 1.442695
    %v646 = vpow.pop %v645
    %v647 = vmul.f32 %v624, 1.442695
    %v648 = vpow.pop %v647
    %v649 = vmul.f32 %v625, 1.442695
    %v650 = vpow.pop %v649
    %v651 = vmul.f32 %v626, 1.442695
    %v652 = vpow.pop %v651
    %v653 = vmul.f32 %v627, 1.442695
    %v654 = vpow.pop %v653
    %v655 = vmul.f32 %v628, 1.442695
    %v656 = vpow.pop %v655
    %v657 = vmul.f32 %v629, 1.442695
    %v658 = vpow.pop %v657
    %v659 = vmul.f32 %v630, 1.442695
    %v660 = vpow.pop %v659
    %v661 = vmul.f32 %v631, 1.442695
    %v662 = vpow.pop %v661
    %v663 = vmul.f32 %v632, 1.442695
    %v664 = vpow.pop %v663
    %v665 = vadd.f32 %v634, 1.0
    %v666 = vadd.f32 %v636, 1.0
    %v667 = vadd.f32 %v638, 1.0
    %v668 = vadd.f32 %v640, 1.0
    %v669 = vadd.f32 %v642, 1.0
    %v670 = vadd.f32 %v644, 1.0
    %v671 = vadd.f32 %v646, 1.0
    %v672 = vadd.f32 %v648, 1.0
    %v673 = vadd.f32 %v650, 1.0
    %v674 = vadd.f32 %v652, 1.0
    %v675 = vadd.f32 %v654, 1.0
    %v676 = vadd.f32 %v656, 1.0
    %v677 = vadd.f32 %v658, 1.0
    %v678 = vadd.f32 %v660, 1.0
    %v679 = vadd.f32 %v662, 1.0
    %v680 = vadd.f32 %v664, 1.0
    %v681 = vrcp.pop %v665
    %v682 = vmul.f32 1.0, %v681
    %v683 = vrcp.pop %v666
    %v684 = vmul.f32 1.0, %v683
    %v685 = vrcp.pop %v667
    %v686 = vmul.f32 1.0, %v685
    %v687 = vrcp.pop %v668
    %v688 = vmul.f32 1.0, %v687
    %v689 = vrcp.pop %v669
    %v690 = vmul.f32 1.0, %v689
    %v691 = vrcp.pop %v670
    %v692 = vmul.f32 1.0, %v691
    %v693 = vrcp.pop %v671
    %v694 = vmul.f32 1.0, %v693
    %v695 = vrcp.pop %v672
    %v696 = vmul.f32 1.0, %v695
    %v697 = vrcp.pop %v673
    %v698 = vmul.f32 1.0, %v697
    %v699 = vrcp.pop %v674
    %v700 = vmul.f32 1.0, %v699
    %v701 = vrcp.pop %v675
    %v702 = vmul.f32 1.0, %v701
    %v703 = vrcp.pop %v676
    %v704 = vmul.f32 1.0, %v703
    %v705 = vrcp.pop %v677
    %v706 = vmul.f32 1.0, %v705
    %v707 = vrcp.pop %v678
    %v708 = vmul.f32 1.0, %v707
    %v709 = vrcp.pop %v679
    %v710 = vmul.f32 1.0, %v709
    %v711 = vrcp.pop %v680
    %v712 = vmul.f32 1.0, %v711
    %v713 = vmul.f32 %v498, %v281
    %v714 = vmul.f32 %v500, %v281
    %v715 = vmul.f32 %v502, %v281
    %v716 = vmul.f32 %v504, %v281
    %v717 = vmul.f32 %v506, %v281
    %v718 = vmul.f32 %v508, %v281
    %v719 = vmul.f32 %v510, %v281
    %v720 = vmul.f32 %v512, %v281
    %v721 = vmul.f32 %v514, %v282
    %v722 = vmul.f32 %v516, %v282
    %v723 = vmul.f32 %v518, %v282
    %v724 = vmul.f32 %v520, %v282
    %v725 = vmul.f32 %v522, %v282
    %v726 = vmul.f32 %v524, %v282
    %v727 = vmul.f32 %v526, %v282
    %v728 = vmul.f32 %v528, %v282
    %v729 = vmul.f32 %v364, %v565
    %v730 = vmul.f32 %v366, %v566
    %v731 = vmul.f32 %v368, %v567
    %v732 = vmul.f32 %v370, %v568
    %v733 = vmul.f32 %v372, %v569
    %v734 = vmul.f32 %v374, %v570
    %v735 = vmul.f32 %v376, %v571
    %v736 = vmul.f32 %v378, %v572
    %v737 = vmul.f32 %v380, %v573
    %v738 = vmul.f32 %v382, %v574
    %v739 = vmul.f32 %v384, %v575
    %v740 = vmul.f32 %v386, %v576
    %v741 = vmul.f32 %v388, %v577
    %v742 = vmul.f32 %v390, %v578
    %v743 = vmul.f32 %v392, %v579
    %v744 = vmul.f32 %v394, %v580
    %v745 = vadd.f32 %v713, %v729
    %v746 = vadd.f32 %v714, %v730
    %v747 = vadd.f32 %v715, %v731
    %v748 = vadd.f32 %v716, %v732
    %v749 = vadd.f32 %v717, %v733
    %v750 = vadd.f32 %v718, %v734
    %v751 = vadd.f32 %v719, %v735
    %v752 = vadd.f32 %v720, %v736
    %v753 = vadd.f32 %v721, %v737
    %v754 = vadd.f32 %v722, %v738
    %v755 = vadd.f32 %v723, %v739
    %v756 = vadd.f32 %v724, %v740
    %v757 = vadd.f32 %v725, %v741
    %v758 = vadd.f32 %v726, %v742
    %v759 = vadd.f32 %v727, %v743
    %v760 = vadd.f32 %v728, %v744
    %v761 = vtanh.pop %v745
    %v762 = vtanh.pop %v746
    %v763 = vtanh.pop %v747
    %v764 = vtanh.pop %v748
    %v765 = vtanh.pop %v749
    %v766 = vtanh.pop %v750
    %v767 = vtanh.pop %v751
    %v768 = vtanh.pop %v752
    %v769 = vtanh.pop %v753
    %v770 = vtanh.pop %v754
    %v771 = vtanh.pop %v755
    %v772 = vtanh.pop %v756
    %v773 = vtanh.pop %v757
    %v774 = vtanh.pop %v758
    %v775 = vtanh.pop %v759
    %v776 = vtanh.pop %v760
    %v777 = vmul.f32 %v682, %v761
    %v778 = vmul.f32 %v684, %v762
    %v779 = vmul.f32 %v686, %v763
    %v780 = vmul.f32 %v688, %v764
    %v781 = vmul.f32 %v690, %v765
    %v782 = vmul.f32 %v692, %v766
    %v783 = vmul.f32 %v694, %v767
    %v784 = vmul.f32 %v696, %v768
    %v785 = vmul.f32 %v698, %v769
    %v786 = vmul.f32 %v700, %v770
    %v787 = vmul.f32 %v702, %v771
    %v788 = vmul.f32 %v704, %v772
    %v789 = vmul.f32 %v706, %v773
    %v790 = vmul.f32 %v708, %v774
    %v791 = vmul.f32 %v710, %v775
    %v792 = vmul.f32 %v712, %v776
    %793 = vst [vmem:[%s4] sm:$0x3] %v777
    %794 = vst [vmem:[%s4 + $0x2] sm:$0x3] %v778
    %795 = vst [vmem:[%s4 + $0x4] sm:$0x3] %v779
    %796 = vst [vmem:[%s4 + $0x6] sm:$0x3] %v780
    %797 = vst [vmem:[%s4 + $0x8] sm:$0x3] %v781
    %798 = vst [vmem:[%s4 + $0xa] sm:$0x3] %v782
    %799 = vst [vmem:[%s4 + $0xc] sm:$0x3] %v783
    %800 = vst [vmem:[%s4 + $0xe] sm:$0x3] %v784
    %801 = vst [vmem:[%s4 + $0x10] sm:$0x3] %v785
    %802 = vst [vmem:[%s4 + $0x12] sm:$0x3] %v786
    %803 = vst [vmem:[%s4 + $0x14] sm:$0x3] %v787
    %804 = vst [vmem:[%s4 + $0x16] sm:$0x3] %v788
    %805 = vst [vmem:[%s4 + $0x18] sm:$0x3] %v789
    %806 = vst [vmem:[%s4 + $0x1a] sm:$0x3] %v790
    %807 = vst [vmem:[%s4 + $0x1c] sm:$0x3] %v791
    %808 = vst [vmem:[%s4 + $0x1e] sm:$0x3] %v792
    %809 = vst [vmem:[#allocation2] sm:$0x3] %v752
    %810 = vst [vmem:[#allocation2 + $0x2] sm:$0x3] %v760
    // Predicated region
    $region18: #{_lambda_.1} parent=1 // pred_check
      _
    $region19: #{_lambda_.1} parent=1 // pred_check_branch
      %812 = sbr.rel (0) target = $region21
    $region20: #{_lambda_.1} parent=1 // pred_region
      _
    $region21: #{_lambda_.1} parent=1 // pred_fallthru
      _
    // Predicated region
    $region22: #{_lambda_.1} parent=1 // pred_check
      _
    $region23: #{_lambda_.1} parent=1 // pred_check_branch
      %814 = sbr.rel (0) target = $region25
    $region24: #{_lambda_.1} parent=1 // pred_region
      %s816 = ssub.s32 64, 64
      %817 = vsyncadd [#allocation3], %s816
      %s818 = sshll.u32 [#allocation2], 4
      %s819 = int_to_ptr.vmem [resolvable:$true] %s818
      %824 = dma.vmem_to_hbm [thread:$0]  %s819, 64, %s5, [#allocation3], 32, 32, 2
    $region25: #{_lambda_.1} parent=1 // pred_fallthru
      _
    // Predicated region
    $region26: #{_lambda_.1} parent=1 // pred_check
      _
    $region27: #{_lambda_.1} parent=1 // pred_check_branch
      %826 = sbr.rel (0) target = $region29
    $region28: #{_lambda_.1} parent=1 // pred_region
      _
    $region29: #{_lambda_.1} parent=1 // pred_fallthru
      _
    // Predicated region
    $region30: #{_lambda_.1} parent=1 // pred_check
      _
    $region31: #{_lambda_.1} parent=1 // pred_check_branch
      %828 = sbr.rel (0) target = $region33
    $region32: #{_lambda_.1} parent=1 // pred_region
      %829 = dma.done [#allocation3], 64
    $region33: #{_lambda_.1} parent=1 // pred_fallthru
      _
    %830 = vsyncpa [#allocation3], 1

</llo_original>
